<compile_context>
chip_gen: v6e
topology: v6e:2x2x1
jax: 0.10.0
libtpu: 0.0.40
codegen_flags: <defaults>
</compile_context>

<pallas_src>
import functools

import jax
import jax.numpy as jnp
from jax.experimental import pallas as pl
from jax.experimental.pallas import tpu as pltpu

NEURONS = 256
IN_FEATURES = 28 * 28          # 784
BN_EPS = 1e-5


def _encoder_kernel(x_ref, w1_ref, w2_ref, bn_ref, b4_ref,
                    w3_hbm, w4_hbm,
                    o_ref,
                    w3_buf, w4_buf, dma_sem,
                    *, batch_real):
    """Whole encoder in one kernel invocation.

    x: [B_pad, 784] bf16 (zero-padded rows), w1/w2 bf16 resident in VMEM,
    w3/w4 prefetched from HBM into VMEM scratch while layers 1-2 compute.
    Output [B_pad, N_out] f32.  `batch_real` is the true batch size (static).
    """
    b_pad = x_ref.shape[0]
    inv_b = 1.0 / float(batch_real)

    # Prefetch layer-3/4 weights; overlaps with the layer-1/2 matmuls below.
    cp3 = pltpu.make_async_copy(w3_hbm, w3_buf, dma_sem.at[0])
    cp4 = pltpu.make_async_copy(w4_hbm, w4_buf, dma_sem.at[1])
    cp3.start()
    cp4.start()

    if batch_real < b_pad:
        row_ids = jax.lax.broadcasted_iota(jnp.int32, (b_pad, 1), 0)
        row_mask = (row_ids < batch_real).astype(jnp.float32)
    else:
        row_mask = None

    def bn_relu(y, g, bt):
        # BatchNorm1d, training-mode biased batch statistics.  Padded rows of
        # the activations are exactly zero and the Linear layers are bias-free
        # (bias cancelled by the mean subtraction), so summing over b_pad rows
        # and dividing by batch_real gives the true statistics.
        mu = jnp.sum(y, axis=0, keepdims=True) * inv_b
        ms = jnp.sum(y * y, axis=0, keepdims=True) * inv_b
        var = jnp.maximum(ms - mu * mu, 0.0)          # guard cancellation
        scale = g * jax.lax.rsqrt(var + BN_EPS)       # gamma folded in
        out = jnp.maximum((y - mu) * scale + bt, 0.0)
        if row_mask is not None:
            out = out * row_mask    # keep padded rows zero for the next layer
        return out

    # Layer 1 (x already bf16; f32 accumulation on the MXU).
    y = jnp.dot(x_ref[...], w1_ref[...], preferred_element_type=jnp.float32)
    h = bn_relu(y, bn_ref[0:1, :], bn_ref[1:2, :])

    # Layer 2.
    y = jnp.dot(h.astype(jnp.bfloat16), w2_ref[...],
                preferred_element_type=jnp.float32)
    h = bn_relu(y, bn_ref[2:3, :], bn_ref[3:4, :])

    # Layer 3 (prefetched weights).
    cp3.wait()
    y = jnp.dot(h.astype(jnp.bfloat16), w3_buf[...],
                preferred_element_type=jnp.float32)
    h = bn_relu(y, bn_ref[4:5, :], bn_ref[5:6, :])

    # Final plain Linear(256 -> latent), lane-padded output.
    cp4.wait()
    o_ref[...] = (jnp.dot(h.astype(jnp.bfloat16), w4_buf[...],
                          preferred_element_type=jnp.float32)
                  + b4_ref[...]).astype(o_ref.dtype)


def _vmem_capacity_bytes():
    """Per-core VMEM capacity; conservative fallback if unqueryable."""
    try:
        info = pltpu.get_tpu_info()
        cap = getattr(info, "vmem_capacity_bytes", None)
        if cap:
            return int(cap)
    except Exception:
        pass
    return 64 * 2**20   # v7x per-TC VMEM (smallest across generations)


def prepare_params(params):
    """One-time parameter preparation (hoisted out of the per-call forward):
    bf16 casts, lane-padding of the output layer, packing of the small
    per-feature vectors.  Call once, reuse across forward passes."""
    (w1, b1, g1, bt1, w2, b2, g2, bt2, w3, b3, g3, bt3, w4, b4) = params
    del b1, b2, b3   # cancelled exactly by BatchNorm's batch-mean subtraction
    latent = w4.shape[1]
    n_out = ((latent + 127) // 128) * 128   # lane-dense output width

    # Pack the six BN vectors (gamma/beta x 3 layers) into one [8, 256] array.
    bn_pack = jnp.zeros((8, NEURONS), jnp.float32)
    bn_pack = bn_pack.at[0].set(g1.reshape(-1)).at[1].set(bt1.reshape(-1))
    bn_pack = bn_pack.at[2].set(g2.reshape(-1)).at[3].set(bt2.reshape(-1))
    bn_pack = bn_pack.at[4].set(g3.reshape(-1)).at[5].set(bt3.reshape(-1))

    w4_p = jnp.zeros((NEURONS, n_out), jnp.float32).at[:, :latent].set(w4)
    b4_p = jnp.zeros((1, n_out), jnp.float32).at[:, :latent].set(b4.reshape(1, -1))

    return dict(
        w1=w1.astype(jnp.bfloat16),
        w2=w2.astype(jnp.bfloat16),
        w3=w3.astype(jnp.bfloat16),
        w4=w4_p.astype(jnp.bfloat16),
        bn=bn_pack,
        b4=b4_p,
        latent=int(latent),
        n_out=int(n_out),
    )


def encoder_forward(images, prep):
    """images: [B, 1, 28, 28] f32 (NCHW).  `prep` from prepare_params().
    Returns [B, latent] f32."""
    B = images.shape[0]
    assert images.shape[1:] == (1, 28, 28)
    latent, n_out = prep["latent"], prep["n_out"]

    # nn.Flatten(start_dim=1); activations cast once to bf16 (MXU operand,
    # f32 accumulation in-kernel), batch padded to a bf16-friendly multiple.
    x = images.reshape(B, IN_FEATURES).astype(jnp.bfloat16)
    B_pad = ((B + 15) // 16) * 16
    if B_pad != B:
        x = jnp.zeros((B_pad, IN_FEATURES), jnp.bfloat16).at[:B].set(x)

    # --- scheduling hints ----------------------------------------------------
    weight_bytes = 2 * (IN_FEATURES * NEURONS + 2 * NEURONS * NEURONS
                        + NEURONS * n_out)
    flops = 2 * B_pad * (IN_FEATURES * NEURONS + 2 * NEURONS * NEURONS
                         + NEURONS * n_out)
    bytes_accessed = (x.size * 2 + weight_bytes
                      + prep["bn"].size * 4 + prep["b4"].size * 4
                      + B_pad * n_out * 4)
    cost = pl.CostEstimate(flops=flops, transcendentals=3 * NEURONS,
                           bytes_accessed=bytes_accessed)

    vmem_needed = (x.size * 2 + weight_bytes
                   + prep["bn"].size * 4 + prep["b4"].size * 4
                   + B_pad * n_out * 4
                   + 8 * B_pad * NEURONS * 4        # live f32 intermediates
                   + (2 << 20))                      # headroom
    vmem_cap = int(0.85 * _vmem_capacity_bytes())
    vmem_limit = int(min(max(vmem_needed, 32 * 2**20), vmem_cap))

    vmem = pl.BlockSpec(memory_space=pltpu.MemorySpace.VMEM)
    hbm_any = pl.BlockSpec(memory_space=pl.ANY)   # prefetched manually in-kernel

    out = pl.pallas_call(
        functools.partial(_encoder_kernel, batch_real=B),
        out_shape=jax.ShapeDtypeStruct((B_pad, n_out), jnp.float32),
        in_specs=[vmem, vmem, vmem, vmem, vmem, hbm_any, hbm_any],
        out_specs=vmem,
        scratch_shapes=[
            pltpu.VMEM((NEURONS, NEURONS), jnp.bfloat16),   # w3 buffer
            pltpu.VMEM((NEURONS, n_out), jnp.bfloat16),     # w4 buffer
            pltpu.SemaphoreType.DMA((2,)),
        ],
        compiler_params=pltpu.CompilerParams(vmem_limit_bytes=vmem_limit),
        cost_estimate=cost,
    )(x, prep["w1"], prep["w2"], prep["bn"], prep["b4"], prep["w3"], prep["w4"])

    return out[:B, :latent]


def init_params(key, latent_size):
    """Deterministic synthetic parameter init (shapes match the PyTorch module)."""
    keys = jax.random.split(key, 8)

    def linear(kw, kb, fan_in, fan_out):
        bound = 1.0 / jnp.sqrt(fan_in)
        w = jax.random.uniform(kw, (fan_in, fan_out), jnp.float32, -bound, bound)
        b = jax.random.uniform(kb, (1, fan_out), jnp.float32, -bound, bound)
        return w, b

    w1, b1 = linear(keys[0], keys[1], IN_FEATURES, NEURONS)
    w2, b2 = linear(keys[2], keys[3], NEURONS, NEURONS)
    w3, b3 = linear(keys[4], keys[5], NEURONS, NEURONS)
    w4, b4 = linear(keys[6], keys[7], NEURONS, latent_size)

    # BatchNorm1d affine params: gamma=1, beta=0 (PyTorch default init).
    g1 = jnp.ones((1, NEURONS), jnp.float32); bt1 = jnp.zeros((1, NEURONS), jnp.float32)
    g2 = jnp.ones((1, NEURONS), jnp.float32); bt2 = jnp.zeros((1, NEURONS), jnp.float32)
    g3 = jnp.ones((1, NEURONS), jnp.float32); bt3 = jnp.zeros((1, NEURONS), jnp.float32)

    return (w1, b1, g1, bt1, w2, b2, g2, bt2, w3, b3, g3, bt3, w4, b4)


def reference_forward(images, params):
    """Pure-JAX reference mirroring the kernel math (bf16 MXU operands, f32
    accumulation, fused one-pass training-mode BN with clamped variance; the
    dropped Linear biases are cancelled exactly by the batch-mean subtraction)."""
    (w1, b1, g1, bt1, w2, b2, g2, bt2, w3, b3, g3, bt3, w4, b4) = params
    h = images.reshape(images.shape[0], IN_FEATURES).astype(jnp.float32)

    def block(h, w, g, bt):
        y = jnp.dot(h.astype(jnp.bfloat16), w.astype(jnp.bfloat16),
                    preferred_element_type=jnp.float32)
        mu = jnp.mean(y, axis=0, keepdims=True)
        var = jnp.maximum(jnp.mean(y * y, axis=0, keepdims=True) - mu * mu, 0.0)
        return jnp.maximum((y - mu) * (g * jax.lax.rsqrt(var + BN_EPS)) + bt, 0.0)

    h = block(h, w1, g1, bt1)
    h = block(h, w2, g2, bt2)
    h = block(h, w3, g3, bt3)
    return jnp.dot(h.astype(jnp.bfloat16), w4.astype(jnp.bfloat16),
                   preferred_element_type=jnp.float32) + b4


if __name__ == "__main__":
    latent_size = 32
    batch = 4

    key = jax.random.PRNGKey(0)
    k_img, k_param = jax.random.split(key)

    images = jax.random.normal(k_img, (batch, 1, 28, 28), jnp.float32)
    params = init_params(k_param, latent_size)
    prep = prepare_params(params)     # one-time prep, reused across forwards

    out = encoder_forward(images, prep)
    out = jax.block_until_ready(out)

    ref = reference_forward(images, params)
    assert out.shape == (batch, latent_size)
    assert jnp.allclose(out, ref, atol=1e-2, rtol=1e-2), "mismatch vs reference"

    print("KERNEL_OK")
</pallas_src>

<mosaic_0001>
module attributes {stable_mosaic.version = 11 : i64} {
  func.func @_encoder_kernel(%arg0: memref<16x784xbf16, #tpu.memory_space<vmem>>, %arg1: memref<784x256xbf16, #tpu.memory_space<vmem>>, %arg2: memref<256x256xbf16, #tpu.memory_space<vmem>>, %arg3: memref<8x256xf32, #tpu.memory_space<vmem>>, %arg4: memref<1x128xf32, #tpu.memory_space<vmem>>, %arg5: memref<256x256xbf16, #tpu.memory_space<any>>, %arg6: memref<256x128xbf16, #tpu.memory_space<any>>, %arg7: memref<16x128xf32, #tpu.memory_space<vmem>>, %arg8: memref<256x256xbf16, #tpu.memory_space<vmem>>, %arg9: memref<256x128xbf16, #tpu.memory_space<vmem>>, %arg10: memref<2x!tpu.dma_semaphore, #tpu.memory_space<semaphore_mem>>) attributes {dimension_semantics = [], scalar_prefetch = 0 : i64, scratch_operands = 3 : i64, tpu.core_type = #tpu.core_type<tc>} {
    %c0_i32 = arith.constant 0 : i32
    %0 = tpu.memref_slice %arg10[%c0_i32] : memref<2x!tpu.dma_semaphore, #tpu.memory_space<semaphore_mem>> -> memref<1x!tpu.dma_semaphore, #tpu.memory_space<semaphore_mem>>
    %1 = tpu.memref_squeeze %0 : memref<1x!tpu.dma_semaphore, #tpu.memory_space<semaphore_mem>> -> memref<!tpu.dma_semaphore, #tpu.memory_space<semaphore_mem>>
    tpu.enqueue_dma source(%arg5 : memref<256x256xbf16, #tpu.memory_space<any>>) target(%arg8 : memref<256x256xbf16, #tpu.memory_space<vmem>>) target_semaphore(%1 : memref<!tpu.dma_semaphore, #tpu.memory_space<semaphore_mem>>)
    %c1_i32 = arith.constant 1 : i32
    %2 = tpu.memref_slice %arg10[%c1_i32] : memref<2x!tpu.dma_semaphore, #tpu.memory_space<semaphore_mem>> -> memref<1x!tpu.dma_semaphore, #tpu.memory_space<semaphore_mem>>
    %3 = tpu.memref_squeeze %2 : memref<1x!tpu.dma_semaphore, #tpu.memory_space<semaphore_mem>> -> memref<!tpu.dma_semaphore, #tpu.memory_space<semaphore_mem>>
    tpu.enqueue_dma source(%arg6 : memref<256x128xbf16, #tpu.memory_space<any>>) target(%arg9 : memref<256x128xbf16, #tpu.memory_space<vmem>>) target_semaphore(%3 : memref<!tpu.dma_semaphore, #tpu.memory_space<semaphore_mem>>)
    %4 = tpu.iota {dimensions = array<i32: 0>} : vector<16x1xi32>
    %c4_i32 = arith.constant 4 : i32
    %5 = vector.broadcast %c4_i32 : i32 to vector<16x1xi32>
    %6 = arith.cmpi slt, %4, %5 : vector<16x1xi32>
    %7 = arith.extui %6 : vector<16x1xi1> to vector<16x1xi32>
    %8 = arith.sitofp %7 : vector<16x1xi32> to vector<16x1xf32>
    %c0 = arith.constant 0 : index
    %c0_0 = arith.constant 0 : index
    %9 = vector.load %arg0[%c0, %c0_0] : memref<16x784xbf16, #tpu.memory_space<vmem>>, vector<16x784xbf16>
    %c0_1 = arith.constant 0 : index
    %c0_2 = arith.constant 0 : index
    %10 = vector.load %arg1[%c0_1, %c0_2] : memref<784x256xbf16, #tpu.memory_space<vmem>>, vector<784x256xbf16>
    %cst = arith.constant dense<0.000000e+00> : vector<16x256xf32>
    %11 = tpu.matmul %9, %10, %cst {dimension_numbers = #tpu.dot_dimension_numbers<[1], [0], [0], [1], [0, 0, 1, 1], [], []>} : vector<16x784xbf16>, vector<784x256xbf16>, vector<16x256xf32> -> vector<16x256xf32>
    %c0_3 = arith.constant 0 : index
    %c0_4 = arith.constant 0 : index
    %12 = vector.load %arg3[%c0_3, %c0_4] : memref<8x256xf32, #tpu.memory_space<vmem>>, vector<1x256xf32>
    %c1 = arith.constant 1 : index
    %c0_5 = arith.constant 0 : index
    %13 = vector.load %arg3[%c1, %c0_5] : memref<8x256xf32, #tpu.memory_space<vmem>>, vector<1x256xf32>
    %cst_6 = arith.constant dense<0.000000e+00> : vector<256xf32>
    %14 = vector.multi_reduction <add>, %11, %cst_6 [0] : vector<16x256xf32> to vector<256xf32>
    %15 = vector.shape_cast %14 : vector<256xf32> to vector<1x256xf32>
    %cst_7 = arith.constant 2.500000e-01 : f32
    %16 = vector.broadcast %cst_7 : f32 to vector<1x256xf32>
    %17 = arith.mulf %15, %16 : vector<1x256xf32>
    %18 = arith.mulf %11, %11 : vector<16x256xf32>
    %cst_8 = arith.constant dense<0.000000e+00> : vector<256xf32>
    %19 = vector.multi_reduction <add>, %18, %cst_8 [0] : vector<16x256xf32> to vector<256xf32>
    %20 = vector.shape_cast %19 : vector<256xf32> to vector<1x256xf32>
    %cst_9 = arith.constant 2.500000e-01 : f32
    %21 = vector.broadcast %cst_9 : f32 to vector<1x256xf32>
    %22 = arith.mulf %20, %21 : vector<1x256xf32>
    %23 = arith.mulf %17, %17 : vector<1x256xf32>
    %24 = arith.subf %22, %23 : vector<1x256xf32>
    %cst_10 = arith.constant 0.000000e+00 : f32
    %25 = vector.broadcast %cst_10 : f32 to vector<1x256xf32>
    %26 = arith.maximumf %24, %25 : vector<1x256xf32>
    %cst_11 = arith.constant 9.99999974E-6 : f32
    %27 = vector.broadcast %cst_11 : f32 to vector<1x256xf32>
    %28 = arith.addf %26, %27 : vector<1x256xf32>
    %29 = math.rsqrt %28 : vector<1x256xf32>
    %30 = arith.mulf %12, %29 : vector<1x256xf32>
    %31 = vector.broadcast %17 : vector<1x256xf32> to vector<16x256xf32>
    %32 = arith.subf %11, %31 : vector<16x256xf32>
    %33 = vector.broadcast %30 : vector<1x256xf32> to vector<16x256xf32>
    %34 = arith.mulf %32, %33 : vector<16x256xf32>
    %35 = vector.broadcast %13 : vector<1x256xf32> to vector<16x256xf32>
    %36 = arith.addf %34, %35 : vector<16x256xf32>
    %cst_12 = arith.constant 0.000000e+00 : f32
    %37 = vector.broadcast %cst_12 : f32 to vector<16x256xf32>
    %38 = arith.maximumf %36, %37 : vector<16x256xf32>
    %39 = vector.broadcast %8 : vector<16x1xf32> to vector<16x256xf32>
    %40 = arith.mulf %38, %39 : vector<16x256xf32>
    %41 = arith.truncf %40 : vector<16x256xf32> to vector<16x256xbf16>
    %c0_13 = arith.constant 0 : index
    %c0_14 = arith.constant 0 : index
    %42 = vector.load %arg2[%c0_13, %c0_14] : memref<256x256xbf16, #tpu.memory_space<vmem>>, vector<256x256xbf16>
    %cst_15 = arith.constant dense<0.000000e+00> : vector<16x256xf32>
    %43 = tpu.matmul %41, %42, %cst_15 {dimension_numbers = #tpu.dot_dimension_numbers<[1], [0], [0], [1], [0, 0, 1, 1], [], []>} : vector<16x256xbf16>, vector<256x256xbf16>, vector<16x256xf32> -> vector<16x256xf32>
    %c2 = arith.constant 2 : index
    %c0_16 = arith.constant 0 : index
    %44 = vector.load %arg3[%c2, %c0_16] : memref<8x256xf32, #tpu.memory_space<vmem>>, vector<1x256xf32>
    %c3 = arith.constant 3 : index
    %c0_17 = arith.constant 0 : index
    %45 = vector.load %arg3[%c3, %c0_17] : memref<8x256xf32, #tpu.memory_space<vmem>>, vector<1x256xf32>
    %cst_18 = arith.constant dense<0.000000e+00> : vector<256xf32>
    %46 = vector.multi_reduction <add>, %43, %cst_18 [0] : vector<16x256xf32> to vector<256xf32>
    %47 = vector.shape_cast %46 : vector<256xf32> to vector<1x256xf32>
    %cst_19 = arith.constant 2.500000e-01 : f32
    %48 = vector.broadcast %cst_19 : f32 to vector<1x256xf32>
    %49 = arith.mulf %47, %48 : vector<1x256xf32>
    %50 = arith.mulf %43, %43 : vector<16x256xf32>
    %cst_20 = arith.constant dense<0.000000e+00> : vector<256xf32>
    %51 = vector.multi_reduction <add>, %50, %cst_20 [0] : vector<16x256xf32> to vector<256xf32>
    %52 = vector.shape_cast %51 : vector<256xf32> to vector<1x256xf32>
    %cst_21 = arith.constant 2.500000e-01 : f32
    %53 = vector.broadcast %cst_21 : f32 to vector<1x256xf32>
    %54 = arith.mulf %52, %53 : vector<1x256xf32>
    %55 = arith.mulf %49, %49 : vector<1x256xf32>
    %56 = arith.subf %54, %55 : vector<1x256xf32>
    %cst_22 = arith.constant 0.000000e+00 : f32
    %57 = vector.broadcast %cst_22 : f32 to vector<1x256xf32>
    %58 = arith.maximumf %56, %57 : vector<1x256xf32>
    %cst_23 = arith.constant 9.99999974E-6 : f32
    %59 = vector.broadcast %cst_23 : f32 to vector<1x256xf32>
    %60 = arith.addf %58, %59 : vector<1x256xf32>
    %61 = math.rsqrt %60 : vector<1x256xf32>
    %62 = arith.mulf %44, %61 : vector<1x256xf32>
    %63 = vector.broadcast %49 : vector<1x256xf32> to vector<16x256xf32>
    %64 = arith.subf %43, %63 : vector<16x256xf32>
    %65 = vector.broadcast %62 : vector<1x256xf32> to vector<16x256xf32>
    %66 = arith.mulf %64, %65 : vector<16x256xf32>
    %67 = vector.broadcast %45 : vector<1x256xf32> to vector<16x256xf32>
    %68 = arith.addf %66, %67 : vector<16x256xf32>
    %cst_24 = arith.constant 0.000000e+00 : f32
    %69 = vector.broadcast %cst_24 : f32 to vector<16x256xf32>
    %70 = arith.maximumf %68, %69 : vector<16x256xf32>
    %71 = vector.broadcast %8 : vector<16x1xf32> to vector<16x256xf32>
    %72 = arith.mulf %70, %71 : vector<16x256xf32>
    %c0_i32_25 = arith.constant 0 : i32
    %73 = tpu.memref_slice %arg10[%c0_i32_25] : memref<2x!tpu.dma_semaphore, #tpu.memory_space<semaphore_mem>> -> memref<1x!tpu.dma_semaphore, #tpu.memory_space<semaphore_mem>>
    %74 = tpu.memref_squeeze %73 : memref<1x!tpu.dma_semaphore, #tpu.memory_space<semaphore_mem>> -> memref<!tpu.dma_semaphore, #tpu.memory_space<semaphore_mem>>
    tpu.wait_dma2 semaphore(%74 : memref<!tpu.dma_semaphore, #tpu.memory_space<semaphore_mem>>) src(%arg5 : memref<256x256xbf16, #tpu.memory_space<any>>) dst(%arg8 : memref<256x256xbf16, #tpu.memory_space<vmem>>)
    %75 = arith.truncf %72 : vector<16x256xf32> to vector<16x256xbf16>
    %c0_26 = arith.constant 0 : index
    %c0_27 = arith.constant 0 : index
    %76 = vector.load %arg8[%c0_26, %c0_27] : memref<256x256xbf16, #tpu.memory_space<vmem>>, vector<256x256xbf16>
    %cst_28 = arith.constant dense<0.000000e+00> : vector<16x256xf32>
    %77 = tpu.matmul %75, %76, %cst_28 {dimension_numbers = #tpu.dot_dimension_numbers<[1], [0], [0], [1], [0, 0, 1, 1], [], []>} : vector<16x256xbf16>, vector<256x256xbf16>, vector<16x256xf32> -> vector<16x256xf32>
    %c4 = arith.constant 4 : index
    %c0_29 = arith.constant 0 : index
    %78 = vector.load %arg3[%c4, %c0_29] : memref<8x256xf32, #tpu.memory_space<vmem>>, vector<1x256xf32>
    %c5 = arith.constant 5 : index
    %c0_30 = arith.constant 0 : index
    %79 = vector.load %arg3[%c5, %c0_30] : memref<8x256xf32, #tpu.memory_space<vmem>>, vector<1x256xf32>
    %cst_31 = arith.constant dense<0.000000e+00> : vector<256xf32>
    %80 = vector.multi_reduction <add>, %77, %cst_31 [0] : vector<16x256xf32> to vector<256xf32>
    %81 = vector.shape_cast %80 : vector<256xf32> to vector<1x256xf32>
    %cst_32 = arith.constant 2.500000e-01 : f32
    %82 = vector.broadcast %cst_32 : f32 to vector<1x256xf32>
    %83 = arith.mulf %81, %82 : vector<1x256xf32>
    %84 = arith.mulf %77, %77 : vector<16x256xf32>
    %cst_33 = arith.constant dense<0.000000e+00> : vector<256xf32>
    %85 = vector.multi_reduction <add>, %84, %cst_33 [0] : vector<16x256xf32> to vector<256xf32>
    %86 = vector.shape_cast %85 : vector<256xf32> to vector<1x256xf32>
    %cst_34 = arith.constant 2.500000e-01 : f32
    %87 = vector.broadcast %cst_34 : f32 to vector<1x256xf32>
    %88 = arith.mulf %86, %87 : vector<1x256xf32>
    %89 = arith.mulf %83, %83 : vector<1x256xf32>
    %90 = arith.subf %88, %89 : vector<1x256xf32>
    %cst_35 = arith.constant 0.000000e+00 : f32
    %91 = vector.broadcast %cst_35 : f32 to vector<1x256xf32>
    %92 = arith.maximumf %90, %91 : vector<1x256xf32>
    %cst_36 = arith.constant 9.99999974E-6 : f32
    %93 = vector.broadcast %cst_36 : f32 to vector<1x256xf32>
    %94 = arith.addf %92, %93 : vector<1x256xf32>
    %95 = math.rsqrt %94 : vector<1x256xf32>
    %96 = arith.mulf %78, %95 : vector<1x256xf32>
    %97 = vector.broadcast %83 : vector<1x256xf32> to vector<16x256xf32>
    %98 = arith.subf %77, %97 : vector<16x256xf32>
    %99 = vector.broadcast %96 : vector<1x256xf32> to vector<16x256xf32>
    %100 = arith.mulf %98, %99 : vector<16x256xf32>
    %101 = vector.broadcast %79 : vector<1x256xf32> to vector<16x256xf32>
    %102 = arith.addf %100, %101 : vector<16x256xf32>
    %cst_37 = arith.constant 0.000000e+00 : f32
    %103 = vector.broadcast %cst_37 : f32 to vector<16x256xf32>
    %104 = arith.maximumf %102, %103 : vector<16x256xf32>
    %105 = vector.broadcast %8 : vector<16x1xf32> to vector<16x256xf32>
    %106 = arith.mulf %104, %105 : vector<16x256xf32>
    %c1_i32_38 = arith.constant 1 : i32
    %107 = tpu.memref_slice %arg10[%c1_i32_38] : memref<2x!tpu.dma_semaphore, #tpu.memory_space<semaphore_mem>> -> memref<1x!tpu.dma_semaphore, #tpu.memory_space<semaphore_mem>>
    %108 = tpu.memref_squeeze %107 : memref<1x!tpu.dma_semaphore, #tpu.memory_space<semaphore_mem>> -> memref<!tpu.dma_semaphore, #tpu.memory_space<semaphore_mem>>
    tpu.wait_dma2 semaphore(%108 : memref<!tpu.dma_semaphore, #tpu.memory_space<semaphore_mem>>) src(%arg6 : memref<256x128xbf16, #tpu.memory_space<any>>) dst(%arg9 : memref<256x128xbf16, #tpu.memory_space<vmem>>)
    %109 = arith.truncf %106 : vector<16x256xf32> to vector<16x256xbf16>
    %c0_39 = arith.constant 0 : index
    %c0_40 = arith.constant 0 : index
    %110 = vector.load %arg9[%c0_39, %c0_40] : memref<256x128xbf16, #tpu.memory_space<vmem>>, vector<256x128xbf16>
    %cst_41 = arith.constant dense<0.000000e+00> : vector<16x128xf32>
    %111 = tpu.matmul %109, %110, %cst_41 {dimension_numbers = #tpu.dot_dimension_numbers<[1], [0], [0], [1], [0, 0, 1, 1], [], []>} : vector<16x256xbf16>, vector<256x128xbf16>, vector<16x128xf32> -> vector<16x128xf32>
    %c0_42 = arith.constant 0 : index
    %c0_43 = arith.constant 0 : index
    %112 = vector.load %arg4[%c0_42, %c0_43] : memref<1x128xf32, #tpu.memory_space<vmem>>, vector<1x128xf32>
    %113 = vector.broadcast %112 : vector<1x128xf32> to vector<16x128xf32>
    %114 = arith.addf %111, %113 : vector<16x128xf32>
    %c0_44 = arith.constant 0 : index
    %c0_45 = arith.constant 0 : index
    %115 = vector.load %arg7[%c0_44, %c0_45] : memref<16x128xf32, #tpu.memory_space<vmem>>, vector<16x128xf32>
    tpu.vector_store %arg7[%c0_44, %c0_45], %114 {strides = array<i32>} : memref<16x128xf32, #tpu.memory_space<vmem>>, vector<16x128xf32>,
    return
  }
}

</mosaic_0001>

<llo_original>
// kernel: tpu_custom_call.1
$region0: #{tpu_custom_call.1}
  #allocation0 [shape = 'u32[]', space=smem, size = 0x4, offset = 0x4, fixed_abs, tag = 'smem constant byte address 0x4 - core index']
  #allocation1 [shape = 'u32[144,128]{1,0:T(1,128)}', space=vmem, size = 0x12000, scoped, tag = 'internal scratch']
  #allocation2 [shape = 'bf16[256,256]{1,0:T(8,128)(2,1)}', space=vmem, size = 0x20000, scoped, tag = 'scratch operand']
  #allocation3 [shape = 'bf16[256,128]{1,0:T(8,128)(2,1)}', space=vmem, size = 0x10000, scoped, tag = 'scratch operand']
  #allocation4 [shape = 's32[2]{0}', space=sflag, size = 0x8, scoped, tag = 'scratch operand']
  #allocation14 [shape = 's32[]', space=sflag, size = 0x4, offset = 0, fixed_abs, tag = 'sflag constant byte address 0x0 - dummy sync flag']
  #allocation15 [shape = 's32[]', space=sflag, size = 0x4, offset = 0, fixed_abs, tag = 'sflag constant byte address 0x0 - dummy sync flag']
  #allocation16 [shape = 'u32[]', space=smem, size = 0x4, offset = 0x44, fixed_abs, tag = 'smem constant byte address 0x44 - assertion arg 0']
  #allocation17 [shape = 'u32[]', space=smem, size = 0x4, offset = 0x48, fixed_abs, tag = 'smem constant byte address 0x48 - assertion arg 1']
  #allocation18 [shape = 's32[]', space=sflag, size = 0x4, offset = 0, fixed_abs, tag = 'sflag constant byte address 0x0 - dummy sync flag']
  #allocation19 [shape = 's32[]', space=sflag, size = 0x4, offset = 0, fixed_abs, tag = 'sflag constant byte address 0x0 - dummy sync flag']
  %s0 = inlined_call_operand.hbm [shape: bf16[16,784], index: 0, kind: input, shape index: {}]
  %s1 = inlined_call_operand.hbm [shape: bf16[784,256], index: 1, kind: input, shape index: {}]
  %s2 = inlined_call_operand.hbm [shape: bf16[256,256], index: 2, kind: input, shape index: {}]
  %s3 = inlined_call_operand.hbm [shape: f32[8,256], index: 3, kind: input, shape index: {}]
  %s4 = inlined_call_operand.vmem [shape: f32[1,128], index: 4, kind: input, shape index: {}]
  %s5 = inlined_call_operand.hbm [shape: bf16[256,256], index: 5, kind: input, shape index: {}]
  %s6 = inlined_call_operand.hbm [shape: bf16[256,128], index: 6, kind: input, shape index: {}]
  %s7 = inlined_call_operand.hbm [shape: f32[16,128], index: 7, kind: output, shape index: {}]
  %s8 = sld [smem:[#allocation0]]
  $region54: #{tpu_custom_call.1} parent=0
    _
  %s10 = ssub.s32 1, %s8
  %s11 = scalar_select 0, %s10, %s8
  $region1: #{tpu_custom_call.1} parent=0
    #allocation5 [shape = 'u8[28672]{0}', space=vmem, size = 0x7000, scoped, tag = 'input window, operand 0, single buffered']
    #allocation6 [shape = 's32[1]{0}', space=sflag, size = 0x4, scoped, tag = 'scoped memory for tpu_custom_call.1']
    #allocation7 [shape = 's32[1]{0}', space=sflag, size = 0x4, scoped, tag = 'scoped memory for tpu_custom_call.1']
    #allocation8 [shape = 'u8[401408]{0}', space=vmem, size = 0x62000, scoped, tag = 'input window, operand 1, single buffered']
    #allocation9 [shape = 's32[1]{0}', space=sflag, size = 0x4, scoped, tag = 'scoped memory for tpu_custom_call.1']
    #allocation10 [shape = 'u8[131072]{0}', space=vmem, size = 0x20000, scoped, tag = 'input window, operand 2, single buffered']
    #allocation11 [shape = 'u8[8192]{0}', space=vmem, size = 0x2000, scoped, tag = 'input window, operand 3, single buffered']
    #allocation12 [shape = 's32[1]{0}', space=sflag, size = 0x4, scoped, tag = 'scoped memory for tpu_custom_call.1']
    #allocation13 [shape = 'u8[8192]{0}', space=vmem, size = 0x2000, scoped, tag = 'output window, operand 0, single buffered']
    %12 = vsyncpa [#allocation6], 0
    %13 = vsyncpa [#allocation9], 0
    %14 = vsyncpa [#allocation12], 0
    %15 = vsyncpa [#allocation7], 0
    // Predicated region
    $region2: #{tpu_custom_call.1} parent=1 // pred_check
      _
    $region3: #{tpu_custom_call.1} parent=1 // pred_check_branch
      %17 = sbr.rel (0) target = $region5
    $region4: #{tpu_custom_call.1} parent=1 // pred_region
      %s19 = ssub.s32 896, 896
      %20 = vsyncadd [#allocation6], %s19
      %s21 = sshll.u32 [#allocation5], 4
      %s22 = int_to_ptr.vmem [resolvable:$true] %s21
      %27 = dma.hbm_to_vmem [thread:$0]  %s0, 896, %s22, [#allocation6], 448, 448, 28
    $region5: #{tpu_custom_call.1} parent=1 // pred_fallthru
      _
    // Predicated region
    $region6: #{tpu_custom_call.1} parent=1 // pred_check
      _
    $region7: #{tpu_custom_call.1} parent=1 // pred_check_branch
      %29 = sbr.rel (0) target = $region9
    $region8: #{tpu_custom_call.1} parent=1 // pred_region
      %s31 = ssub.s32 12544, 12544
      %32 = vsyncadd [#allocation9], %s31
      %s33 = sshll.u32 [#allocation8], 4
      %s34 = int_to_ptr.vmem [resolvable:$true] %s33
      %39 = dma.hbm_to_vmem [thread:$0]  %s1, 12544, %s34, [#allocation9], 128, 128, 8
    $region9: #{tpu_custom_call.1} parent=1 // pred_fallthru
      _
    // Predicated region
    $region10: #{tpu_custom_call.1} parent=1 // pred_check
      _
    $region11: #{tpu_custom_call.1} parent=1 // pred_check_branch
      %41 = sbr.rel (0) target = $region13
    $region12: #{tpu_custom_call.1} parent=1 // pred_region
      %s43 = ssub.s32 4096, 4096
      %44 = vsyncadd [#allocation9], %s43
      %s45 = sshll.u32 [#allocation10], 4
      %s46 = int_to_ptr.vmem [resolvable:$true] %s45
      %51 = dma.hbm_to_vmem [thread:$0]  %s2, 4096, %s46, [#allocation9], 128, 128, 8
    $region13: #{tpu_custom_call.1} parent=1 // pred_fallthru
      _
    // Predicated region
    $region14: #{tpu_custom_call.1} parent=1 // pred_check
      _
    $region15: #{tpu_custom_call.1} parent=1 // pred_check_branch
      %53 = sbr.rel (0) target = $region17
    $region16: #{tpu_custom_call.1} parent=1 // pred_region
      %s55 = ssub.s32 256, 256
      %56 = vsyncadd [#allocation12], %s55
      %s58 = sshll.u32 [#allocation11], 4
      %s59 = int_to_ptr.vmem [resolvable:$true] %s58
      %61 = dma.hbm_to_vmem [thread:$0]  %s3, 256, %s59, [#allocation12]
    $region17: #{tpu_custom_call.1} parent=1 // pred_fallthru
      _
    // Predicated region
    $region18: #{tpu_custom_call.1} parent=1 // pred_check
      _
    $region19: #{tpu_custom_call.1} parent=1 // pred_check_branch
      %63 = sbr.rel (0) target = $region21
    $region20: #{tpu_custom_call.1} parent=1 // pred_region
      _
    $region21: #{tpu_custom_call.1} parent=1 // pred_fallthru
      _
    // Predicated region
    $region22: #{tpu_custom_call.1} parent=1 // pred_check
      _
    $region23: #{tpu_custom_call.1} parent=1 // pred_check_branch
      %65 = sbr.rel (0) target = $region25
    $region24: #{tpu_custom_call.1} parent=1 // pred_region
      %66 = dma.done [#allocation6], 896
    $region25: #{tpu_custom_call.1} parent=1 // pred_fallthru
      _
    // Predicated region
    $region26: #{tpu_custom_call.1} parent=1 // pred_check
      _
    $region27: #{tpu_custom_call.1} parent=1 // pred_check_branch
      %68 = sbr.rel (0) target = $region29
    $region28: #{tpu_custom_call.1} parent=1 // pred_region
      %69 = dma.done [#allocation9], 12544
    $region29: #{tpu_custom_call.1} parent=1 // pred_fallthru
      _
    // Predicated region
    $region30: #{tpu_custom_call.1} parent=1 // pred_check
      _
    $region31: #{tpu_custom_call.1} parent=1 // pred_check_branch
      %71 = sbr.rel (0) target = $region33
    $region32: #{tpu_custom_call.1} parent=1 // pred_region
      %72 = dma.done [#allocation9], 4096
    $region33: #{tpu_custom_call.1} parent=1 // pred_fallthru
      _
    // Predicated region
    $region34: #{tpu_custom_call.1} parent=1 // pred_check
      _
    $region35: #{tpu_custom_call.1} parent=1 // pred_check_branch
      %74 = sbr.rel (0) target = $region37
    $region36: #{tpu_custom_call.1} parent=1 // pred_region
      %75 = dma.done [#allocation12], 256
    $region37: #{tpu_custom_call.1} parent=1 // pred_fallthru
      _
    // Predicated region
    $region38: #{tpu_custom_call.1} parent=1 // pred_check
      _
    $region39: #{tpu_custom_call.1} parent=1 // pred_check_branch
      %78 = sbr.rel target = $region41
    $region40: #{tpu_custom_call.1} parent=1 // pred_region
      %79 = sst [smem:[#allocation16]] [#allocation15]
      %80 = sst [smem:[#allocation17]] [#allocation14]
    $region41: #{tpu_custom_call.1} parent=1 // pred_fallthru
      _
    %82 = shalt.err (0)
    %s84 = sshll.u32 [#allocation2], 4
    %s85 = int_to_ptr.vmem [resolvable:$true] %s84
    %87 = dma.hbm_to_vmem [thread:$0]  %s5, 4096, %s85, [#allocation4]
    %s88 = scalar_lea.sflag [#allocation4], 1
    // Predicated region
    $region42: #{tpu_custom_call.1} parent=1 // pred_check
      _
    $region43: #{tpu_custom_call.1} parent=1 // pred_check_branch
      %90 = sbr.rel target = $region45
    $region44: #{tpu_custom_call.1} parent=1 // pred_region
      %91 = sst [smem:[#allocation16]] [#allocation19]
      %92 = sst [smem:[#allocation17]] [#allocation18]
    $region45: #{tpu_custom_call.1} parent=1 // pred_fallthru
      _
    %94 = shalt.err (0)
    %s96 = sshll.u32 [#allocation3], 4
    %s97 = int_to_ptr.vmem [resolvable:$true] %s96
    %99 = dma.hbm_to_vmem [thread:$0]  %s6, 2048, %s97, %s88
    %v100 = vlaneseq
    %v101 = vshrl.u32 %v100, 7
    %v102 = vadd.s32 %v101, 8
    %vm103 = vcmp.lt.s32.totalorder %v101, 4
    %vm104 = vcmp.lt.s32.totalorder %v102, 4
    %v105 = vsel %vm103, 1, 0
    %v106 = vsel %vm104, 1, 0
    %v107 = vcvt.s32.f32 %v105
    %v108 = vcvt.s32.f32 %v106
    %v109 = vld [vmem:[#allocation5] sm:$0xff]
    %v110 = vld [vmem:[#allocation5 + $0x8] sm:$0xff]
    %v111 = vld [vmem:[#allocation5 + $0x10] sm:$0xff]
    %v112 = vld [vmem:[#allocation5 + $0x18] sm:$0xf]
    %v113 = vld [vmem:[#allocation5 + $0x1c] sm:$0xff]
    %v114 = vld [vmem:[#allocation5 + $0x24] sm:$0xff]
    %v115 = vld [vmem:[#allocation5 + $0x2c] sm:$0xff]
    %v116 = vld [vmem:[#allocation5 + $0x34] sm:$0xf]
    %v117 = vld [vmem:[#allocation8] sm:$0xff]
    %v118 = vld [vmem:[#allocation8 + $0x8] sm:$0xff]
    %v119 = vld [vmem:[#allocation8 + $0x10] sm:$0xff]
    %v120 = vld [vmem:[#allocation8 + $0x18] sm:$0xff]
    %v121 = vld [vmem:[#allocation8 + $0x20] sm:$0xff]
    %v122 = vld [vmem:[#allocation8 + $0x28] sm:$0xff]
    %v123 = vld [vmem:[#allocation8 + $0x30] sm:$0xff]
    %v124 = vld [vmem:[#allocation8 + $0x38] sm:$0xff]
    %v125 = vld [vmem:[#allocation8 + $0x40] sm:$0xff]
    %v126 = vld [vmem:[#allocation8 + $0x48] sm:$0xff]
    %v127 = vld [vmem:[#allocation8 + $0x50] sm:$0xff]
    %v128 = vld [vmem:[#allocation8 + $0x58] sm:$0xff]
    %v129 = vld [vmem:[#allocation8 + $0x60] sm:$0xff]
    %v130 = vld [vmem:[#allocation8 + $0x68] sm:$0xff]
    %v131 = vld [vmem:[#allocation8 + $0x70] sm:$0xff]
    %v132 = vld [vmem:[#allocation8 + $0x78] sm:$0xff]
    %v133 = vld [vmem:[#allocation8 + $0x80] sm:$0xff]
    %v134 = vld [vmem:[#allocation8 + $0x88] sm:$0xff]
    %v135 = vld [vmem:[#allocation8 + $0x90] sm:$0xff]
    %v136 = vld [vmem:[#allocation8 + $0x98] sm:$0xff]
    %v137 = vld [vmem:[#allocation8 + $0xa0] sm:$0xff]
    %v138 = vld [vmem:[#allocation8 + $0xa8] sm:$0xff]
    %v139 = vld [vmem:[#allocation8 + $0xb0] sm:$0xff]
    %v140 = vld [vmem:[#allocation8 + $0xb8] sm:$0xff]
    %v141 = vld [vmem:[#allocation8 + $0xc0] sm:$0xff]
    %v142 = vld [vmem:[#allocation8 + $0xc8] sm:$0xff]
    %v143 = vld [vmem:[#allocation8 + $0xd0] sm:$0xff]
    %v144 = vld [vmem:[#allocation8 + $0xd8] sm:$0xff]
    %v145 = vld [vmem:[#allocation8 + $0xe0] sm:$0xff]
    %v146 = vld [vmem:[#allocation8 + $0xe8] sm:$0xff]
    %v147 = vld [vmem:[#allocation8 + $0xf0] sm:$0xff]
    %v148 = vld [vmem:[#allocation8 + $0xf8] sm:$0xff]
    %v149 = vld [vmem:[#allocation8 + $0x100] sm:$0xff]
    %v150 = vld [vmem:[#allocation8 + $0x108] sm:$0xff]
    %v151 = vld [vmem:[#allocation8 + $0x110] sm:$0xff]
    %v152 = vld [vmem:[#allocation8 + $0x118] sm:$0xff]
    %v153 = vld [vmem:[#allocation8 + $0x120] sm:$0xff]
    %v154 = vld [vmem:[#allocation8 + $0x128] sm:$0xff]
    %v155 = vld [vmem:[#allocation8 + $0x130] sm:$0xff]
    %v156 = vld [vmem:[#allocation8 + $0x138] sm:$0xff]
    %v157 = vld [vmem:[#allocation8 + $0x140] sm:$0xff]
    %v158 = vld [vmem:[#allocation8 + $0x148] sm:$0xff]
    %v159 = vld [vmem:[#allocation8 + $0x150] sm:$0xff]
    %v160 = vld [vmem:[#allocation8 + $0x158] sm:$0xff]
    %v161 = vld [vmem:[#allocation8 + $0x160] sm:$0xff]
    %v162 = vld [vmem:[#allocation8 + $0x168] sm:$0xff]
    %v163 = vld [vmem:[#allocation8 + $0x170] sm:$0xff]
    %v164 = vld [vmem:[#allocation8 + $0x178] sm:$0xff]
    %v165 = vld [vmem:[#allocation8 + $0x180] sm:$0xff]
    %v166 = vld [vmem:[#allocation8 + $0x188] sm:$0xff]
    %v167 = vld [vmem:[#allocation8 + $0x190] sm:$0xff]
    %v168 = vld [vmem:[#allocation8 + $0x198] sm:$0xff]
    %v169 = vld [vmem:[#allocation8 + $0x1a0] sm:$0xff]
    %v170 = vld [vmem:[#allocation8 + $0x1a8] sm:$0xff]
    %v171 = vld [vmem:[#allocation8 + $0x1b0] sm:$0xff]
    %v172 = vld [vmem:[#allocation8 + $0x1b8] sm:$0xff]
    %v173 = vld [vmem:[#allocation8 + $0x1c0] sm:$0xff]
    %v174 = vld [vmem:[#allocation8 + $0x1c8] sm:$0xff]
    %v175 = vld [vmem:[#allocation8 + $0x1d0] sm:$0xff]
    %v176 = vld [vmem:[#allocation8 + $0x1d8] sm:$0xff]
    %v177 = vld [vmem:[#allocation8 + $0x1e0] sm:$0xff]
    %v178 = vld [vmem:[#allocation8 + $0x1e8] sm:$0xff]
    %v179 = vld [vmem:[#allocation8 + $0x1f0] sm:$0xff]
    %v180 = vld [vmem:[#allocation8 + $0x1f8] sm:$0xff]
    %v181 = vld [vmem:[#allocation8 + $0x200] sm:$0xff]
    %v182 = vld [vmem:[#allocation8 + $0x208] sm:$0xff]
    %v183 = vld [vmem:[#allocation8 + $0x210] sm:$0xff]
    %v184 = vld [vmem:[#allocation8 + $0x218] sm:$0xff]
    %v185 = vld [vmem:[#allocation8 + $0x220] sm:$0xff]
    %v186 = vld [vmem:[#allocation8 + $0x228] sm:$0xff]
    %v187 = vld [vmem:[#allocation8 + $0x230] sm:$0xff]
    %v188 = vld [vmem:[#allocation8 + $0x238] sm:$0xff]
    %v189 = vld [vmem:[#allocation8 + $0x240] sm:$0xff]
    %v190 = vld [vmem:[#allocation8 + $0x248] sm:$0xff]
    %v191 = vld [vmem:[#allocation8 + $0x250] sm:$0xff]
    %v192 = vld [vmem:[#allocation8 + $0x258] sm:$0xff]
    %v193 = vld [vmem:[#allocation8 + $0x260] sm:$0xff]
    %v194 = vld [vmem:[#allocation8 + $0x268] sm:$0xff]
    %v195 = vld [vmem:[#allocation8 + $0x270] sm:$0xff]
    %v196 = vld [vmem:[#allocation8 + $0x278] sm:$0xff]
    %v197 = vld [vmem:[#allocation8 + $0x280] sm:$0xff]
    %v198 = vld [vmem:[#allocation8 + $0x288] sm:$0xff]
    %v199 = vld [vmem:[#allocation8 + $0x290] sm:$0xff]
    %v200 = vld [vmem:[#allocation8 + $0x298] sm:$0xff]
    %v201 = vld [vmem:[#allocation8 + $0x2a0] sm:$0xff]
    %v202 = vld [vmem:[#allocation8 + $0x2a8] sm:$0xff]
    %v203 = vld [vmem:[#allocation8 + $0x2b0] sm:$0xff]
    %v204 = vld [vmem:[#allocation8 + $0x2b8] sm:$0xff]
    %v205 = vld [vmem:[#allocation8 + $0x2c0] sm:$0xff]
    %v206 = vld [vmem:[#allocation8 + $0x2c8] sm:$0xff]
    %v207 = vld [vmem:[#allocation8 + $0x2d0] sm:$0xff]
    %v208 = vld [vmem:[#allocation8 + $0x2d8] sm:$0xff]
    %v209 = vld [vmem:[#allocation8 + $0x2e0] sm:$0xff]
    %v210 = vld [vmem:[#allocation8 + $0x2e8] sm:$0xff]
    %v211 = vld [vmem:[#allocation8 + $0x2f0] sm:$0xff]
    %v212 = vld [vmem:[#allocation8 + $0x2f8] sm:$0xff]
    %v213 = vld [vmem:[#allocation8 + $0x300] sm:$0xff]
    %v214 = vld [vmem:[#allocation8 + $0x308] sm:$0xff]
    %v223 = vunpack.c.l.b16 %v109
    %v224 = vunpack.c.h.b16 %v109
    %v225 = vunpack.c.l.b16 %v110
    %v226 = vunpack.c.h.b16 %v110
    %v227 = vunpack.c.l.b16 %v111
    %v228 = vunpack.c.h.b16 %v111
    %v229 = vunpack.c.l.b16 %v112
    %v230 = vunpack.c.l.b16 %v113
    %v231 = vunpack.c.h.b16 %v113
    %v232 = vunpack.c.l.b16 %v114
    %v233 = vunpack.c.h.b16 %v114
    %v234 = vunpack.c.l.b16 %v115
    %v235 = vunpack.c.h.b16 %v115
    %v236 = vunpack.c.l.b16 %v116
    %v237 = vpack.c.b16 %v230, %v223
    %v238 = vpack.c.b16 %v231, %v224
    %v239 = vpack.c.b16 %v232, %v225
    %v240 = vpack.c.b16 %v233, %v226
    %v241 = vpack.c.b16 %v234, %v227
    %v242 = vpack.c.b16 %v235, %v228
    %v243 = vpack.c.b16 %v236, %v229
    %v348 = vunpack.c.l.b16 %v117
    %v349 = vunpack.c.h.b16 %v117
    %v350 = vunpack.c.l.b16 %v118
    %v351 = vunpack.c.h.b16 %v118
    %v352 = vunpack.c.l.b16 %v119
    %v353 = vunpack.c.h.b16 %v119
    %v354 = vunpack.c.l.b16 %v120
    %v355 = vunpack.c.h.b16 %v120
    %v356 = vunpack.c.l.b16 %v121
    %v357 = vunpack.c.h.b16 %v121
    %v358 = vunpack.c.l.b16 %v122
    %v359 = vunpack.c.h.b16 %v122
    %v360 = vunpack.c.l.b16 %v123
    %v361 = vunpack.c.h.b16 %v123
    %v362 = vunpack.c.l.b16 %v124
    %v363 = vunpack.c.h.b16 %v124
    %v364 = vunpack.c.l.b16 %v125
    %v365 = vunpack.c.h.b16 %v125
    %v366 = vunpack.c.l.b16 %v126
    %v367 = vunpack.c.h.b16 %v126
    %v368 = vunpack.c.l.b16 %v127
    %v369 = vunpack.c.h.b16 %v127
    %v370 = vunpack.c.l.b16 %v128
    %v371 = vunpack.c.h.b16 %v128
    %v372 = vunpack.c.l.b16 %v129
    %v373 = vunpack.c.h.b16 %v129
    %v374 = vunpack.c.l.b16 %v130
    %v375 = vunpack.c.h.b16 %v130
    %v376 = vunpack.c.l.b16 %v131
    %v377 = vunpack.c.h.b16 %v131
    %v378 = vunpack.c.l.b16 %v132
    %v379 = vunpack.c.h.b16 %v132
    %v380 = vunpack.c.l.b16 %v133
    %v381 = vunpack.c.h.b16 %v133
    %v382 = vunpack.c.l.b16 %v134
    %v383 = vunpack.c.h.b16 %v134
    %v384 = vunpack.c.l.b16 %v135
    %v385 = vunpack.c.h.b16 %v135
    %v386 = vunpack.c.l.b16 %v136
    %v387 = vunpack.c.h.b16 %v136
    %v388 = vunpack.c.l.b16 %v137
    %v389 = vunpack.c.h.b16 %v137
    %v390 = vunpack.c.l.b16 %v138
    %v391 = vunpack.c.h.b16 %v138
    %v392 = vunpack.c.l.b16 %v139
    %v393 = vunpack.c.h.b16 %v139
    %v394 = vunpack.c.l.b16 %v140
    %v395 = vunpack.c.h.b16 %v140
    %v396 = vunpack.c.l.b16 %v141
    %v397 = vunpack.c.h.b16 %v141
    %v398 = vunpack.c.l.b16 %v142
    %v399 = vunpack.c.h.b16 %v142
    %v400 = vunpack.c.l.b16 %v143
    %v401 = vunpack.c.h.b16 %v143
    %v402 = vunpack.c.l.b16 %v144
    %v403 = vunpack.c.h.b16 %v144
    %v404 = vunpack.c.l.b16 %v145
    %v405 = vunpack.c.h.b16 %v145
    %v406 = vunpack.c.l.b16 %v146
    %v407 = vunpack.c.h.b16 %v146
    %v408 = vunpack.c.l.b16 %v147
    %v409 = vunpack.c.h.b16 %v147
    %v410 = vunpack.c.l.b16 %v148
    %v411 = vunpack.c.h.b16 %v148
    %v412 = vunpack.c.l.b16 %v149
    %v413 = vunpack.c.h.b16 %v149
    %v414 = vunpack.c.l.b16 %v150
    %v415 = vunpack.c.h.b16 %v150
    %v416 = vunpack.c.l.b16 %v151
    %v417 = vunpack.c.h.b16 %v151
    %v418 = vunpack.c.l.b16 %v152
    %v419 = vunpack.c.h.b16 %v152
    %v420 = vunpack.c.l.b16 %v153
    %v421 = vunpack.c.h.b16 %v153
    %v422 = vunpack.c.l.b16 %v154
    %v423 = vunpack.c.h.b16 %v154
    %v424 = vunpack.c.l.b16 %v155
    %v425 = vunpack.c.h.b16 %v155
    %v426 = vunpack.c.l.b16 %v156
    %v427 = vunpack.c.h.b16 %v156
    %v428 = vunpack.c.l.b16 %v157
    %v429 = vunpack.c.h.b16 %v157
    %v430 = vunpack.c.l.b16 %v158
    %v431 = vunpack.c.h.b16 %v158
    %v432 = vunpack.c.l.b16 %v159
    %v433 = vunpack.c.h.b16 %v159
    %v434 = vunpack.c.l.b16 %v160
    %v435 = vunpack.c.h.b16 %v160
    %v436 = vunpack.c.l.b16 %v161
    %v437 = vunpack.c.h.b16 %v161
    %v438 = vunpack.c.l.b16 %v162
    %v439 = vunpack.c.h.b16 %v162
    %v440 = vunpack.c.l.b16 %v163
    %v441 = vunpack.c.h.b16 %v163
    %v442 = vunpack.c.l.b16 %v164
    %v443 = vunpack.c.h.b16 %v164
    %v444 = vunpack.c.l.b16 %v165
    %v445 = vunpack.c.h.b16 %v165
    %v446 = vunpack.c.l.b16 %v166
    %v447 = vunpack.c.h.b16 %v166
    %v448 = vunpack.c.l.b16 %v167
    %v449 = vunpack.c.h.b16 %v167
    %v450 = vunpack.c.l.b16 %v168
    %v451 = vunpack.c.h.b16 %v168
    %v452 = vunpack.c.l.b16 %v169
    %v453 = vunpack.c.h.b16 %v169
    %v454 = vunpack.c.l.b16 %v170
    %v455 = vunpack.c.h.b16 %v170
    %v456 = vunpack.c.l.b16 %v171
    %v457 = vunpack.c.h.b16 %v171
    %v458 = vunpack.c.l.b16 %v172
    %v459 = vunpack.c.h.b16 %v172
    %v460 = vunpack.c.l.b16 %v173
    %v461 = vunpack.c.h.b16 %v173
    %v462 = vunpack.c.l.b16 %v174
    %v463 = vunpack.c.h.b16 %v174
    %v464 = vunpack.c.l.b16 %v175
    %v465 = vunpack.c.h.b16 %v175
    %v466 = vunpack.c.l.b16 %v176
    %v467 = vunpack.c.h.b16 %v176
    %v468 = vunpack.c.l.b16 %v177
    %v469 = vunpack.c.h.b16 %v177
    %v470 = vunpack.c.l.b16 %v178
    %v471 = vunpack.c.h.b16 %v178
    %v472 = vunpack.c.l.b16 %v179
    %v473 = vunpack.c.h.b16 %v179
    %v474 = vunpack.c.l.b16 %v180
    %v475 = vunpack.c.h.b16 %v180
    %v476 = vunpack.c.l.b16 %v181
    %v477 = vunpack.c.h.b16 %v181
    %v478 = vunpack.c.l.b16 %v182
    %v479 = vunpack.c.h.b16 %v182
    %v480 = vunpack.c.l.b16 %v183
    %v481 = vunpack.c.h.b16 %v183
    %v482 = vunpack.c.l.b16 %v184
    %v483 = vunpack.c.h.b16 %v184
    %v484 = vunpack.c.l.b16 %v185
    %v485 = vunpack.c.h.b16 %v185
    %v486 = vunpack.c.l.b16 %v186
    %v487 = vunpack.c.h.b16 %v186
    %v488 = vunpack.c.l.b16 %v187
    %v489 = vunpack.c.h.b16 %v187
    %v490 = vunpack.c.l.b16 %v188
    %v491 = vunpack.c.h.b16 %v188
    %v492 = vunpack.c.l.b16 %v189
    %v493 = vunpack.c.h.b16 %v189
    %v494 = vunpack.c.l.b16 %v190
    %v495 = vunpack.c.h.b16 %v190
    %v496 = vunpack.c.l.b16 %v191
    %v497 = vunpack.c.h.b16 %v191
    %v498 = vunpack.c.l.b16 %v192
    %v499 = vunpack.c.h.b16 %v192
    %v500 = vunpack.c.l.b16 %v193
    %v501 = vunpack.c.h.b16 %v193
    %v502 = vunpack.c.l.b16 %v194
    %v503 = vunpack.c.h.b16 %v194
    %v504 = vunpack.c.l.b16 %v195
    %v505 = vunpack.c.h.b16 %v195
    %v506 = vunpack.c.l.b16 %v196
    %v507 = vunpack.c.h.b16 %v196
    %v508 = vunpack.c.l.b16 %v197
    %v509 = vunpack.c.h.b16 %v197
    %v510 = vunpack.c.l.b16 %v198
    %v511 = vunpack.c.h.b16 %v198
    %v512 = vunpack.c.l.b16 %v199
    %v513 = vunpack.c.h.b16 %v199
    %v514 = vunpack.c.l.b16 %v200
    %v515 = vunpack.c.h.b16 %v200
    %v516 = vunpack.c.l.b16 %v201
    %v517 = vunpack.c.h.b16 %v201
    %v518 = vunpack.c.l.b16 %v202
    %v519 = vunpack.c.h.b16 %v202
    %v520 = vunpack.c.l.b16 %v203
    %v521 = vunpack.c.h.b16 %v203
    %v522 = vunpack.c.l.b16 %v204
    %v523 = vunpack.c.h.b16 %v204
    %v524 = vunpack.c.l.b16 %v205
    %v525 = vunpack.c.h.b16 %v205
    %v526 = vunpack.c.l.b16 %v206
    %v527 = vunpack.c.h.b16 %v206
    %v528 = vunpack.c.l.b16 %v207
    %v529 = vunpack.c.h.b16 %v207
    %v530 = vunpack.c.l.b16 %v208
    %v531 = vunpack.c.h.b16 %v208
    %v532 = vunpack.c.l.b16 %v209
    %v533 = vunpack.c.h.b16 %v209
    %v534 = vunpack.c.l.b16 %v210
    %v535 = vunpack.c.h.b16 %v210
    %v536 = vunpack.c.l.b16 %v211
    %v537 = vunpack.c.h.b16 %v211
    %v538 = vunpack.c.l.b16 %v212
    %v539 = vunpack.c.h.b16 %v212
    %v540 = vunpack.c.l.b16 %v213
    %v541 = vunpack.c.h.b16 %v213
    %v542 = vunpack.c.l.b16 %v214
    %v543 = vunpack.c.h.b16 %v214
    %v544 = vpack.c.b16 %v350, %v348
    %v545 = vpack.c.b16 %v351, %v349
    %v546 = vpack.c.b16 %v354, %v352
    %v547 = vpack.c.b16 %v355, %v353
    %v548 = vpack.c.b16 %v358, %v356
    %v549 = vpack.c.b16 %v359, %v357
    %v550 = vpack.c.b16 %v362, %v360
    %v551 = vpack.c.b16 %v363, %v361
    %v552 = vpack.c.b16 %v366, %v364
    %v553 = vpack.c.b16 %v367, %v365
    %v554 = vpack.c.b16 %v370, %v368
    %v555 = vpack.c.b16 %v371, %v369
    %v556 = vpack.c.b16 %v374, %v372
    %v557 = vpack.c.b16 %v375, %v373
    %v558 = vpack.c.b16 %v378, %v376
    %v559 = vpack.c.b16 %v379, %v377
    %v560 = vpack.c.b16 %v382, %v380
    %v561 = vpack.c.b16 %v383, %v381
    %v562 = vpack.c.b16 %v386, %v384
    %v563 = vpack.c.b16 %v387, %v385
    %v564 = vpack.c.b16 %v390, %v388
    %v565 = vpack.c.b16 %v391, %v389
    %v566 = vpack.c.b16 %v394, %v392
    %v567 = vpack.c.b16 %v395, %v393
    %v568 = vpack.c.b16 %v398, %v396
    %v569 = vpack.c.b16 %v399, %v397
    %v570 = vpack.c.b16 %v402, %v400
    %v571 = vpack.c.b16 %v403, %v401
    %v572 = vpack.c.b16 %v406, %v404
    %v573 = vpack.c.b16 %v407, %v405
    %v574 = vpack.c.b16 %v410, %v408
    %v575 = vpack.c.b16 %v411, %v409
    %v576 = vpack.c.b16 %v414, %v412
    %v577 = vpack.c.b16 %v415, %v413
    %v578 = vpack.c.b16 %v418, %v416
    %v579 = vpack.c.b16 %v419, %v417
    %v580 = vpack.c.b16 %v422, %v420
    %v581 = vpack.c.b16 %v423, %v421
    %v582 = vpack.c.b16 %v426, %v424
    %v583 = vpack.c.b16 %v427, %v425
    %v584 = vpack.c.b16 %v430, %v428
    %v585 = vpack.c.b16 %v431, %v429
    %v586 = vpack.c.b16 %v434, %v432
    %v587 = vpack.c.b16 %v435, %v433
    %v588 = vpack.c.b16 %v438, %v436
    %v589 = vpack.c.b16 %v439, %v437
    %v590 = vpack.c.b16 %v442, %v440
    %v591 = vpack.c.b16 %v443, %v441
    %v592 = vpack.c.b16 %v446, %v444
    %v593 = vpack.c.b16 %v447, %v445
    %v594 = vpack.c.b16 %v450, %v448
    %v595 = vpack.c.b16 %v451, %v449
    %v596 = vpack.c.b16 %v454, %v452
    %v597 = vpack.c.b16 %v455, %v453
    %v598 = vpack.c.b16 %v458, %v456
    %v599 = vpack.c.b16 %v459, %v457
    %v600 = vpack.c.b16 %v462, %v460
    %v601 = vpack.c.b16 %v463, %v461
    %v602 = vpack.c.b16 %v466, %v464
    %v603 = vpack.c.b16 %v467, %v465
    %v604 = vpack.c.b16 %v470, %v468
    %v605 = vpack.c.b16 %v471, %v469
    %v606 = vpack.c.b16 %v474, %v472
    %v607 = vpack.c.b16 %v475, %v473
    %v608 = vpack.c.b16 %v478, %v476
    %v609 = vpack.c.b16 %v479, %v477
    %v610 = vpack.c.b16 %v482, %v480
    %v611 = vpack.c.b16 %v483, %v481
    %v612 = vpack.c.b16 %v486, %v484
    %v613 = vpack.c.b16 %v487, %v485
    %v614 = vpack.c.b16 %v490, %v488
    %v615 = vpack.c.b16 %v491, %v489
    %v616 = vpack.c.b16 %v494, %v492
    %v617 = vpack.c.b16 %v495, %v493
    %v618 = vpack.c.b16 %v498, %v496
    %v619 = vpack.c.b16 %v499, %v497
    %v620 = vpack.c.b16 %v502, %v500
    %v621 = vpack.c.b16 %v503, %v501
    %v622 = vpack.c.b16 %v506, %v504
    %v623 = vpack.c.b16 %v507, %v505
    %v624 = vpack.c.b16 %v510, %v508
    %v625 = vpack.c.b16 %v511, %v509
    %v626 = vpack.c.b16 %v514, %v512
    %v627 = vpack.c.b16 %v515, %v513
    %v628 = vpack.c.b16 %v518, %v516
    %v629 = vpack.c.b16 %v519, %v517
    %v630 = vpack.c.b16 %v522, %v520
    %v631 = vpack.c.b16 %v523, %v521
    %v632 = vpack.c.b16 %v526, %v524
    %v633 = vpack.c.b16 %v527, %v525
    %v634 = vpack.c.b16 %v530, %v528
    %v635 = vpack.c.b16 %v531, %v529
    %v636 = vpack.c.b16 %v534, %v532
    %v637 = vpack.c.b16 %v535, %v533
    %v638 = vpack.c.b16 %v538, %v536
    %v639 = vpack.c.b16 %v539, %v537
    %v640 = vpack.c.b16 %v542, %v540
    %v641 = vpack.c.b16 %v543, %v541
    %vm740 = vcmask 130048
    %v742 = vsel %vm740, %v243, 0
    %744 = vmatprep.subr.bf16.mxu0 %v559
    %745 = vmatpush1.bf16.msra.mxu0 %v558
    %746 = vmatprep.subr.bf16.mxu0 %v557
    %747 = vmatpush1.bf16.msra.mxu0 %v556
    %748 = vmatprep.subr.bf16.mxu0 %v555
    %749 = vmatpush1.bf16.msra.mxu0 %v554
    %750 = vmatprep.subr.bf16.mxu0 %v553
    %751 = vmatpush1.bf16.msra.mxu0 %v552
    %752 = vmatprep.subr.bf16.mxu0 %v551
    %753 = vmatpush1.bf16.msra.mxu0 %v550
    %754 = vmatprep.subr.bf16.mxu0 %v549
    %755 = vmatpush1.bf16.msra.mxu0 %v548
    %756 = vmatprep.subr.bf16.mxu0 %v547
    %757 = vmatpush1.bf16.msra.mxu0 %v546
    %758 = vmatprep.subr.bf16.mxu0 %v545
    %759 = vmatpush1.bf16.msra.mxu0 %v544
    %760 = vmatprep.subr.bf16.mxu0 %v575
    %761 = vmatpush2.bf16.msra.mxu0 %v574
    %762 = vmatprep.subr.bf16.mxu0 %v573
    %763 = vmatpush2.bf16.msra.mxu0 %v572
    %764 = vmatprep.subr.bf16.mxu0 %v571
    %765 = vmatpush2.bf16.msra.mxu0 %v570
    %766 = vmatprep.subr.bf16.mxu0 %v569
    %767 = vmatpush2.bf16.msra.mxu0 %v568
    %768 = vmatprep.subr.bf16.mxu0 %v567
    %769 = vmatpush2.bf16.msra.mxu0 %v566
    %770 = vmatprep.subr.bf16.mxu0 %v565
    %771 = vmatpush2.bf16.msra.mxu0 %v564
    %772 = vmatprep.subr.bf16.mxu0 %v563
    %773 = vmatpush2.bf16.msra.mxu0 %v562
    %774 = vmatprep.subr.bf16.mxu0 %v561
    %775 = vmatpush2.bf16.msra.mxu0 %v560
    %776 = vmatprep.mubr.bf16.mxu0 %v238
    %777 = vmatmul.mubr.bf16.gmra.mxu0 %v237
    %v778 = vpop.f32.mrf.mxu0
    %v779 = vadd.f32 0.0, %v778
    %v780 = vpop.f32.mrf.mxu0
    %v781 = vadd.f32 0.0, %v780
    %v782 = vpop.f32.mrf.mxu0
    %v783 = vadd.f32 0.0, %v782
    %v784 = vpop.f32.mrf.mxu0
    %v785 = vadd.f32 0.0, %v784
    %786 = vdwg.mxu0
    %787 = vmatprep.subr.bf16.mxu0 %v591
    %788 = vmatpush1.bf16.msra.mxu0 %v590
    %789 = vmatprep.subr.bf16.mxu0 %v589
    %790 = vmatpush1.bf16.msra.mxu0 %v588
    %791 = vmatprep.subr.bf16.mxu0 %v587
    %792 = vmatpush1.bf16.msra.mxu0 %v586
    %793 = vmatprep.subr.bf16.mxu0 %v585
    %794 = vmatpush1.bf16.msra.mxu0 %v584
    %795 = vmatprep.subr.bf16.mxu0 %v583
    %796 = vmatpush1.bf16.msra.mxu0 %v582
    %797 = vmatprep.subr.bf16.mxu0 %v581
    %798 = vmatpush1.bf16.msra.mxu0 %v580
    %799 = vmatprep.subr.bf16.mxu0 %v579
    %800 = vmatpush1.bf16.msra.mxu0 %v578
    %801 = vmatprep.subr.bf16.mxu0 %v577
    %802 = vmatpush1.bf16.msra.mxu0 %v576
    %803 = vmatprep.subr.bf16.mxu0 %v607
    %804 = vmatpush2.bf16.msra.mxu0 %v606
    %805 = vmatprep.subr.bf16.mxu0 %v605
    %806 = vmatpush2.bf16.msra.mxu0 %v604
    %807 = vmatprep.subr.bf16.mxu0 %v603
    %808 = vmatpush2.bf16.msra.mxu0 %v602
    %809 = vmatprep.subr.bf16.mxu0 %v601
    %810 = vmatpush2.bf16.msra.mxu0 %v600
    %811 = vmatprep.subr.bf16.mxu0 %v599
    %812 = vmatpush2.bf16.msra.mxu0 %v598
    %813 = vmatprep.subr.bf16.mxu0 %v597
    %814 = vmatpush2.bf16.msra.mxu0 %v596
    %815 = vmatprep.subr.bf16.mxu0 %v595
    %816 = vmatpush2.bf16.msra.mxu0 %v594
    %817 = vmatprep.subr.bf16.mxu0 %v593
    %818 = vmatpush2.bf16.msra.mxu0 %v592
    %819 = vmatprep.mubr.bf16.mxu0 %v240
    %820 = vmatmul.mubr.bf16.gmra.mxu0 %v239
    %v821 = vpop.f32.mrf.mxu0
    %v822 = vadd.f32 %v779, %v821
    %v823 = vpop.f32.mrf.mxu0
    %v824 = vadd.f32 %v781, %v823
    %v825 = vpop.f32.mrf.mxu0
    %v826 = vadd.f32 %v783, %v825
    %v827 = vpop.f32.mrf.mxu0
    %v828 = vadd.f32 %v785, %v827
    %829 = vdwg.mxu0
    %830 = vmatprep.subr.bf16.mxu0 %v623
    %831 = vmatpush1.bf16.msra.mxu0 %v622
    %832 = vmatprep.subr.bf16.mxu0 %v621
    %833 = vmatpush1.bf16.msra.mxu0 %v620
    %834 = vmatprep.subr.bf16.mxu0 %v619
    %835 = vmatpush1.bf16.msra.mxu0 %v618
    %836 = vmatprep.subr.bf16.mxu0 %v617
    %837 = vmatpush1.bf16.msra.mxu0 %v616
    %838 = vmatprep.subr.bf16.mxu0 %v615
    %839 = vmatpush1.bf16.msra.mxu0 %v614
    %840 = vmatprep.subr.bf16.mxu0 %v613
    %841 = vmatpush1.bf16.msra.mxu0 %v612
    %842 = vmatprep.subr.bf16.mxu0 %v611
    %843 = vmatpush1.bf16.msra.mxu0 %v610
    %844 = vmatprep.subr.bf16.mxu0 %v609
    %845 = vmatpush1.bf16.msra.mxu0 %v608
    %846 = vmatprep.subr.bf16.mxu0 %v639
    %847 = vmatpush2.bf16.msra.mxu0 %v638
    %848 = vmatprep.subr.bf16.mxu0 %v637
    %849 = vmatpush2.bf16.msra.mxu0 %v636
    %850 = vmatprep.subr.bf16.mxu0 %v635
    %851 = vmatpush2.bf16.msra.mxu0 %v634
    %852 = vmatprep.subr.bf16.mxu0 %v633
    %853 = vmatpush2.bf16.msra.mxu0 %v632
    %854 = vmatprep.subr.bf16.mxu0 %v631
    %855 = vmatpush2.bf16.msra.mxu0 %v630
    %856 = vmatprep.subr.bf16.mxu0 %v629
    %857 = vmatpush2.bf16.msra.mxu0 %v628
    %858 = vmatprep.subr.bf16.mxu0 %v627
    %859 = vmatpush2.bf16.msra.mxu0 %v626
    %860 = vmatprep.subr.bf16.mxu0 %v625
    %861 = vmatpush2.bf16.msra.mxu0 %v624
    %862 = vmatprep.mubr.bf16.mxu0 %v242
    %863 = vmatmul.mubr.bf16.gmra.mxu0 %v241
    %v864 = vpop.f32.mrf.mxu0
    %v865 = vadd.f32 %v822, %v864
    %v866 = vpop.f32.mrf.mxu0
    %v867 = vadd.f32 %v824, %v866
    %v868 = vpop.f32.mrf.mxu0
    %v869 = vadd.f32 %v826, %v868
    %v870 = vpop.f32.mrf.mxu0
    %v871 = vadd.f32 %v828, %v870
    %872 = vdwg.mxu0
    %873 = vmatprep.subr.bf16.mxu0 0
    %874 = vmatpush1.bf16.msra.mxu0 0
    %875 = vmatprep.subr.bf16.mxu0 0
    %876 = vmatpush1.bf16.msra.mxu0 0
    %877 = vmatprep.subr.bf16.mxu0 0
    %878 = vmatpush1.bf16.msra.mxu0 0
    %879 = vmatprep.subr.bf16.mxu0 0
    %880 = vmatpush1.bf16.msra.mxu0 0
    %881 = vmatprep.subr.bf16.mxu0 0
    %882 = vmatpush1.bf16.msra.mxu0 0
    %883 = vmatprep.subr.bf16.mxu0 0
    %884 = vmatpush1.bf16.msra.mxu0 0
    %885 = vmatprep.subr.bf16.mxu0 0
    %886 = vmatpush1.bf16.msra.mxu0 0
    %887 = vmatprep.subr.bf16.mxu0 %v641
    %888 = vmatpush1.bf16.msra.mxu0 %v640
    %889 = vmatprep.subr.bf16.mxu0 0
    %890 = vmatpush2.bf16.msra.mxu0 0
    %891 = vmatprep.subr.bf16.mxu0 0
    %892 = vmatpush2.bf16.msra.mxu0 0
    %893 = vmatprep.subr.bf16.mxu0 0
    %894 = vmatpush2.bf16.msra.mxu0 0
    %895 = vmatprep.subr.bf16.mxu0 0
    %896 = vmatpush2.bf16.msra.mxu0 0
    %897 = vmatprep.subr.bf16.mxu0 0
    %898 = vmatpush2.bf16.msra.mxu0 0
    %899 = vmatprep.subr.bf16.mxu0 0
    %900 = vmatpush2.bf16.msra.mxu0 0
    %901 = vmatprep.subr.bf16.mxu0 0
    %902 = vmatpush2.bf16.msra.mxu0 0
    %903 = vmatprep.subr.bf16.mxu0 0
    %904 = vmatpush2.bf16.msra.mxu0 0
    %905 = vmatprep.mubr.bf16.mxu0 0
    %906 = vmatmul.mubr.bf16.gmra.mxu0 %v742
    %v907 = vpop.f32.mrf.mxu0
    %v908 = vadd.f32 %v865, %v907
    %v909 = vpop.f32.mrf.mxu0
    %v910 = vadd.f32 %v867, %v909
    %v911 = vpop.f32.mrf.mxu0
    %v912 = vadd.f32 %v869, %v911
    %v913 = vpop.f32.mrf.mxu0
    %v914 = vadd.f32 %v871, %v913
    %915 = vdwg.mxu0
    %v916 = vld [vmem:[#allocation11] ss:$8 sm:$0x3]
    %s917 = scalar_lea.vmem [#allocation11], 1
    %v918 = vld [vmem:[%s917] ss:$8 sm:$0x3]
    %v919 = vadd.f32 %v908, %v912
    %v920 = vrot.slane %v919, 4
    %v921 = vadd.f32 %v919, %v920
    %v922 = vrot.slane %v921, 2
    %v923 = vadd.f32 %v921, %v922
    %v924 = vrot.slane %v923, 1
    %v925 = vadd.f32 %v923, %v924
    %v926 = vadd.f32 %v910, %v914
    %v927 = vrot.slane %v926, 4
    %v928 = vadd.f32 %v926, %v927
    %v929 = vrot.slane %v928, 2
    %v930 = vadd.f32 %v928, %v929
    %v931 = vrot.slane %v930, 1
    %v932 = vadd.f32 %v930, %v931
    %v933 = vmul.f32 %v925, 0.25
    %v934 = vmul.f32 %v932, 0.25
    %v935 = vmul.f32 %v908, %v908
    %v936 = vmul.f32 %v910, %v910
    %v937 = vmul.f32 %v912, %v912
    %v938 = vmul.f32 %v914, %v914
    %v939 = vadd.f32 %v935, %v937
    %v940 = vrot.slane %v939, 4
    %v941 = vadd.f32 %v939, %v940
    %v942 = vrot.slane %v941, 2
    %v943 = vadd.f32 %v941, %v942
    %v944 = vrot.slane %v943, 1
    %v945 = vadd.f32 %v943, %v944
    %v946 = vadd.f32 %v936, %v938
    %v947 = vrot.slane %v946, 4
    %v948 = vadd.f32 %v946, %v947
    %v949 = vrot.slane %v948, 2
    %v950 = vadd.f32 %v948, %v949
    %v951 = vrot.slane %v950, 1
    %v952 = vadd.f32 %v950, %v951
    %v953 = vmul.f32 %v945, 0.25
    %v954 = vmul.f32 %v952, 0.25
    %v955 = vmul.f32 %v933, %v933
    %v956 = vmul.f32 %v934, %v934
    %v957 = vsub.f32 %v953, %v955
    %v958 = vsub.f32 %v954, %v956
    %v959 = vmax.f32 %v957, 0.0
    %v960 = vmax.f32 %v958, 0.0
    %v961 = vadd.f32 %v959, 1e-05
    %v962 = vadd.f32 %v960, 1e-05
    %v963 = vrsqrt.pop %v961
    %v964 = vrsqrt.pop %v962
    %v967 = vcombine.low %v963, %v964
    %v969 = vunpack.c.l.s4 1966171168
    %v970 = vunpack.c.0.s8 %v969
    %v971 = vlaneseq
    %v972 = vshrl.u32 %v971, 7
    %v973 = vsub.s32 %v970, %v972
    %v974 = vrot.slane %v967, %v973
    %v976 = vunpack.c.l.s4 1966171168
    %v977 = vunpack.c.0.s8 %v976
    %v978 = vlaneseq
    %v979 = vshrl.u32 %v978, 7
    %v980 = vsub.s32 %v977, %v979
    %v981 = vrot.slane %v974, %v980
    %v983 = vmul.f32 %v916, %v981
    %v984 = vsub.f32 %v908, %v933
    %v985 = vsub.f32 %v910, %v934
    %v986 = vsub.f32 %v912, %v933
    %v987 = vsub.f32 %v914, %v934
    %v989 = vlaneseq
    %v990 = vshrl.u32 %v989, 7
    %v991 = vsub.s32 0, %v990
    %v992 = vrot.slane %v983, %v991
    %v993 = vlaneseq
    %v994 = vshrl.u32 %v993, 7
    %v995 = vsub.s32 1, %v994
    %v996 = vrot.slane %v983, %v995
    %v999 = vmul.f32 %v984, %v992
    %v1000 = vmul.f32 %v985, %v996
    %v1001 = vmul.f32 %v986, %v992
    %v1002 = vmul.f32 %v987, %v996
    %v1004 = vlaneseq
    %v1005 = vshrl.u32 %v1004, 7
    %v1006 = vsub.s32 0, %v1005
    %v1007 = vrot.slane %v918, %v1006
    %v1008 = vlaneseq
    %v1009 = vshrl.u32 %v1008, 7
    %v1010 = vsub.s32 1, %v1009
    %v1011 = vrot.slane %v918, %v1010
    %v1014 = vadd.f32 %v999, %v1007
    %v1015 = vadd.f32 %v1000, %v1011
    %v1016 = vadd.f32 %v1001, %v1007
    %v1017 = vadd.f32 %v1002, %v1011
    %v1018 = vmax.f32 %v1014, 0.0
    %v1019 = vmax.f32 %v1015, 0.0
    %v1020 = vmax.f32 %v1016, 0.0
    %v1021 = vmax.f32 %v1017, 0.0
    %v1022 = vmul.f32 %v1018, %v107
    %v1023 = vmul.f32 %v1019, %v107
    %v1024 = vmul.f32 %v1020, %v108
    %v1025 = vmul.f32 %v1021, %v108
    %v1026 = vpack.c.bf16 %v1024, %v1022
    %v1027 = vpack.c.bf16 %v1025, %v1023
    %v1028 = vld [vmem:[#allocation10] sm:$0xff]
    %v1029 = vld [vmem:[#allocation10 + $0x8] sm:$0xff]
    %v1030 = vld [vmem:[#allocation10 + $0x10] sm:$0xff]
    %v1031 = vld [vmem:[#allocation10 + $0x18] sm:$0xff]
    %v1032 = vld [vmem:[#allocation10 + $0x20] sm:$0xff]
    %v1033 = vld [vmem:[#allocation10 + $0x28] sm:$0xff]
    %v1034 = vld [vmem:[#allocation10 + $0x30] sm:$0xff]
    %v1035 = vld [vmem:[#allocation10 + $0x38] sm:$0xff]
    %v1036 = vld [vmem:[#allocation10 + $0x40] sm:$0xff]
    %v1037 = vld [vmem:[#allocation10 + $0x48] sm:$0xff]
    %v1038 = vld [vmem:[#allocation10 + $0x50] sm:$0xff]
    %v1039 = vld [vmem:[#allocation10 + $0x58] sm:$0xff]
    %v1040 = vld [vmem:[#allocation10 + $0x60] sm:$0xff]
    %v1041 = vld [vmem:[#allocation10 + $0x68] sm:$0xff]
    %v1042 = vld [vmem:[#allocation10 + $0x70] sm:$0xff]
    %v1043 = vld [vmem:[#allocation10 + $0x78] sm:$0xff]
    %v1044 = vld [vmem:[#allocation10 + $0x80] sm:$0xff]
    %v1045 = vld [vmem:[#allocation10 + $0x88] sm:$0xff]
    %v1046 = vld [vmem:[#allocation10 + $0x90] sm:$0xff]
    %v1047 = vld [vmem:[#allocation10 + $0x98] sm:$0xff]
    %v1048 = vld [vmem:[#allocation10 + $0xa0] sm:$0xff]
    %v1049 = vld [vmem:[#allocation10 + $0xa8] sm:$0xff]
    %v1050 = vld [vmem:[#allocation10 + $0xb0] sm:$0xff]
    %v1051 = vld [vmem:[#allocation10 + $0xb8] sm:$0xff]
    %v1052 = vld [vmem:[#allocation10 + $0xc0] sm:$0xff]
    %v1053 = vld [vmem:[#allocation10 + $0xc8] sm:$0xff]
    %v1054 = vld [vmem:[#allocation10 + $0xd0] sm:$0xff]
    %v1055 = vld [vmem:[#allocation10 + $0xd8] sm:$0xff]
    %v1056 = vld [vmem:[#allocation10 + $0xe0] sm:$0xff]
    %v1057 = vld [vmem:[#allocation10 + $0xe8] sm:$0xff]
    %v1058 = vld [vmem:[#allocation10 + $0xf0] sm:$0xff]
    %v1059 = vld [vmem:[#allocation10 + $0xf8] sm:$0xff]
    %v1092 = vunpack.c.l.b16 %v1028
    %v1093 = vunpack.c.h.b16 %v1028
    %v1094 = vunpack.c.l.b16 %v1029
    %v1095 = vunpack.c.h.b16 %v1029
    %v1096 = vunpack.c.l.b16 %v1030
    %v1097 = vunpack.c.h.b16 %v1030
    %v1098 = vunpack.c.l.b16 %v1031
    %v1099 = vunpack.c.h.b16 %v1031
    %v1100 = vunpack.c.l.b16 %v1032
    %v1101 = vunpack.c.h.b16 %v1032
    %v1102 = vunpack.c.l.b16 %v1033
    %v1103 = vunpack.c.h.b16 %v1033
    %v1104 = vunpack.c.l.b16 %v1034
    %v1105 = vunpack.c.h.b16 %v1034
    %v1106 = vunpack.c.l.b16 %v1035
    %v1107 = vunpack.c.h.b16 %v1035
    %v1108 = vunpack.c.l.b16 %v1036
    %v1109 = vunpack.c.h.b16 %v1036
    %v1110 = vunpack.c.l.b16 %v1037
    %v1111 = vunpack.c.h.b16 %v1037
    %v1112 = vunpack.c.l.b16 %v1038
    %v1113 = vunpack.c.h.b16 %v1038
    %v1114 = vunpack.c.l.b16 %v1039
    %v1115 = vunpack.c.h.b16 %v1039
    %v1116 = vunpack.c.l.b16 %v1040
    %v1117 = vunpack.c.h.b16 %v1040
    %v1118 = vunpack.c.l.b16 %v1041
    %v1119 = vunpack.c.h.b16 %v1041
    %v1120 = vunpack.c.l.b16 %v1042
    %v1121 = vunpack.c.h.b16 %v1042
    %v1122 = vunpack.c.l.b16 %v1043
    %v1123 = vunpack.c.h.b16 %v1043
    %v1124 = vunpack.c.l.b16 %v1044
    %v1125 = vunpack.c.h.b16 %v1044
    %v1126 = vunpack.c.l.b16 %v1045
    %v1127 = vunpack.c.h.b16 %v1045
    %v1128 = vunpack.c.l.b16 %v1046
    %v1129 = vunpack.c.h.b16 %v1046
    %v1130 = vunpack.c.l.b16 %v1047
    %v1131 = vunpack.c.h.b16 %v1047
    %v1132 = vunpack.c.l.b16 %v1048
    %v1133 = vunpack.c.h.b16 %v1048
    %v1134 = vunpack.c.l.b16 %v1049
    %v1135 = vunpack.c.h.b16 %v1049
    %v1136 = vunpack.c.l.b16 %v1050
    %v1137 = vunpack.c.h.b16 %v1050
    %v1138 = vunpack.c.l.b16 %v1051
    %v1139 = vunpack.c.h.b16 %v1051
    %v1140 = vunpack.c.l.b16 %v1052
    %v1141 = vunpack.c.h.b16 %v1052
    %v1142 = vunpack.c.l.b16 %v1053
    %v1143 = vunpack.c.h.b16 %v1053
    %v1144 = vunpack.c.l.b16 %v1054
    %v1145 = vunpack.c.h.b16 %v1054
    %v1146 = vunpack.c.l.b16 %v1055
    %v1147 = vunpack.c.h.b16 %v1055
    %v1148 = vunpack.c.l.b16 %v1056
    %v1149 = vunpack.c.h.b16 %v1056
    %v1150 = vunpack.c.l.b16 %v1057
    %v1151 = vunpack.c.h.b16 %v1057
    %v1152 = vunpack.c.l.b16 %v1058
    %v1153 = vunpack.c.h.b16 %v1058
    %v1154 = vunpack.c.l.b16 %v1059
    %v1155 = vunpack.c.h.b16 %v1059
    %v1156 = vpack.c.b16 %v1094, %v1092
    %v1157 = vpack.c.b16 %v1095, %v1093
    %v1158 = vpack.c.b16 %v1098, %v1096
    %v1159 = vpack.c.b16 %v1099, %v1097
    %v1160 = vpack.c.b16 %v1102, %v1100
    %v1161 = vpack.c.b16 %v1103, %v1101
    %v1162 = vpack.c.b16 %v1106, %v1104
    %v1163 = vpack.c.b16 %v1107, %v1105
    %v1164 = vpack.c.b16 %v1110, %v1108
    %v1165 = vpack.c.b16 %v1111, %v1109
    %v1166 = vpack.c.b16 %v1114, %v1112
    %v1167 = vpack.c.b16 %v1115, %v1113
    %v1168 = vpack.c.b16 %v1118, %v1116
    %v1169 = vpack.c.b16 %v1119, %v1117
    %v1170 = vpack.c.b16 %v1122, %v1120
    %v1171 = vpack.c.b16 %v1123, %v1121
    %v1172 = vpack.c.b16 %v1126, %v1124
    %v1173 = vpack.c.b16 %v1127, %v1125
    %v1174 = vpack.c.b16 %v1130, %v1128
    %v1175 = vpack.c.b16 %v1131, %v1129
    %v1176 = vpack.c.b16 %v1134, %v1132
    %v1177 = vpack.c.b16 %v1135, %v1133
    %v1178 = vpack.c.b16 %v1138, %v1136
    %v1179 = vpack.c.b16 %v1139, %v1137
    %v1180 = vpack.c.b16 %v1142, %v1140
    %v1181 = vpack.c.b16 %v1143, %v1141
    %v1182 = vpack.c.b16 %v1146, %v1144
    %v1183 = vpack.c.b16 %v1147, %v1145
    %v1184 = vpack.c.b16 %v1150, %v1148
    %v1185 = vpack.c.b16 %v1151, %v1149
    %v1186 = vpack.c.b16 %v1154, %v1152
    %v1187 = vpack.c.b16 %v1155, %v1153
    %1220 = vmatprep.subr.bf16.mxu0 %v1171
    %1221 = vmatpush1.bf16.msra.mxu0 %v1170
    %1222 = vmatprep.subr.bf16.mxu0 %v1169
    %1223 = vmatpush1.bf16.msra.mxu0 %v1168
    %1224 = vmatprep.subr.bf16.mxu0 %v1167
    %1225 = vmatpush1.bf16.msra.mxu0 %v1166
    %1226 = vmatprep.subr.bf16.mxu0 %v1165
    %1227 = vmatpush1.bf16.msra.mxu0 %v1164
    %1228 = vmatprep.subr.bf16.mxu0 %v1163
    %1229 = vmatpush1.bf16.msra.mxu0 %v1162
    %1230 = vmatprep.subr.bf16.mxu0 %v1161
    %1231 = vmatpush1.bf16.msra.mxu0 %v1160
    %1232 = vmatprep.subr.bf16.mxu0 %v1159
    %1233 = vmatpush1.bf16.msra.mxu0 %v1158
    %1234 = vmatprep.subr.bf16.mxu0 %v1157
    %1235 = vmatpush1.bf16.msra.mxu0 %v1156
    %1236 = vmatprep.subr.bf16.mxu0 %v1187
    %1237 = vmatpush2.bf16.msra.mxu0 %v1186
    %1238 = vmatprep.subr.bf16.mxu0 %v1185
    %1239 = vmatpush2.bf16.msra.mxu0 %v1184
    %1240 = vmatprep.subr.bf16.mxu0 %v1183
    %1241 = vmatpush2.bf16.msra.mxu0 %v1182
    %1242 = vmatprep.subr.bf16.mxu0 %v1181
    %1243 = vmatpush2.bf16.msra.mxu0 %v1180
    %1244 = vmatprep.subr.bf16.mxu0 %v1179
    %1245 = vmatpush2.bf16.msra.mxu0 %v1178
    %1246 = vmatprep.subr.bf16.mxu0 %v1177
    %1247 = vmatpush2.bf16.msra.mxu0 %v1176
    %1248 = vmatprep.subr.bf16.mxu0 %v1175
    %1249 = vmatpush2.bf16.msra.mxu0 %v1174
    %1250 = vmatprep.subr.bf16.mxu0 %v1173
    %1251 = vmatpush2.bf16.msra.mxu0 %v1172
    %1252 = vmatprep.mubr.bf16.mxu0 %v1027
    %1253 = vmatmul.mubr.bf16.gmra.mxu0 %v1026
    %v1254 = vpop.f32.mrf.mxu0
    %v1255 = vadd.f32 0.0, %v1254
    %v1256 = vpop.f32.mrf.mxu0
    %v1257 = vadd.f32 0.0, %v1256
    %v1258 = vpop.f32.mrf.mxu0
    %v1259 = vadd.f32 0.0, %v1258
    %v1260 = vpop.f32.mrf.mxu0
    %v1261 = vadd.f32 0.0, %v1260
    %1262 = vdwg.mxu0
    %s1263 = scalar_lea.vmem [#allocation11], 2
    %v1264 = vld [vmem:[%s1263] ss:$8 sm:$0x3]
    %s1265 = scalar_lea.vmem [#allocation11], 3
    %v1266 = vld [vmem:[%s1265] ss:$8 sm:$0x3]
    %v1267 = vadd.f32 %v1255, %v1259
    %v1268 = vrot.slane %v1267, 4
    %v1269 = vadd.f32 %v1267, %v1268
    %v1270 = vrot.slane %v1269, 2
    %v1271 = vadd.f32 %v1269, %v1270
    %v1272 = vrot.slane %v1271, 1
    %v1273 = vadd.f32 %v1271, %v1272
    %v1274 = vadd.f32 %v1257, %v1261
    %v1275 = vrot.slane %v1274, 4
    %v1276 = vadd.f32 %v1274, %v1275
    %v1277 = vrot.slane %v1276, 2
    %v1278 = vadd.f32 %v1276, %v1277
    %v1279 = vrot.slane %v1278, 1
    %v1280 = vadd.f32 %v1278, %v1279
    %v1281 = vmul.f32 %v1273, 0.25
    %v1282 = vmul.f32 %v1280, 0.25
    %v1283 = vmul.f32 %v1255, %v1255
    %v1284 = vmul.f32 %v1257, %v1257
    %v1285 = vmul.f32 %v1259, %v1259
    %v1286 = vmul.f32 %v1261, %v1261
    %v1287 = vadd.f32 %v1283, %v1285
    %v1288 = vrot.slane %v1287, 4
    %v1289 = vadd.f32 %v1287, %v1288
    %v1290 = vrot.slane %v1289, 2
    %v1291 = vadd.f32 %v1289, %v1290
    %v1292 = vrot.slane %v1291, 1
    %v1293 = vadd.f32 %v1291, %v1292
    %v1294 = vadd.f32 %v1284, %v1286
    %v1295 = vrot.slane %v1294, 4
    %v1296 = vadd.f32 %v1294, %v1295
    %v1297 = vrot.slane %v1296, 2
    %v1298 = vadd.f32 %v1296, %v1297
    %v1299 = vrot.slane %v1298, 1
    %v1300 = vadd.f32 %v1298, %v1299
    %v1301 = vmul.f32 %v1293, 0.25
    %v1302 = vmul.f32 %v1300, 0.25
    %v1303 = vmul.f32 %v1281, %v1281
    %v1304 = vmul.f32 %v1282, %v1282
    %v1305 = vsub.f32 %v1301, %v1303
    %v1306 = vsub.f32 %v1302, %v1304
    %v1307 = vmax.f32 %v1305, 0.0
    %v1308 = vmax.f32 %v1306, 0.0
    %v1309 = vadd.f32 %v1307, 1e-05
    %v1310 = vadd.f32 %v1308, 1e-05
    %v1311 = vrsqrt.pop %v1309
    %v1312 = vrsqrt.pop %v1310
    %v1315 = vcombine.low %v1311, %v1312
    %v1317 = vunpack.c.l.s4 1966171168
    %v1318 = vunpack.c.0.s8 %v1317
    %v1319 = vlaneseq
    %v1320 = vshrl.u32 %v1319, 7
    %v1321 = vsub.s32 %v1318, %v1320
    %v1322 = vrot.slane %v1315, %v1321
    %v1324 = vunpack.c.l.s4 1966171168
    %v1325 = vunpack.c.0.s8 %v1324
    %v1326 = vlaneseq
    %v1327 = vshrl.u32 %v1326, 7
    %v1328 = vsub.s32 %v1325, %v1327
    %v1329 = vrot.slane %v1322, %v1328
    %v1331 = vmul.f32 %v1264, %v1329
    %v1332 = vsub.f32 %v1255, %v1281
    %v1333 = vsub.f32 %v1257, %v1282
    %v1334 = vsub.f32 %v1259, %v1281
    %v1335 = vsub.f32 %v1261, %v1282
    %v1337 = vlaneseq
    %v1338 = vshrl.u32 %v1337, 7
    %v1339 = vsub.s32 0, %v1338
    %v1340 = vrot.slane %v1331, %v1339
    %v1341 = vlaneseq
    %v1342 = vshrl.u32 %v1341, 7
    %v1343 = vsub.s32 1, %v1342
    %v1344 = vrot.slane %v1331, %v1343
    %v1347 = vmul.f32 %v1332, %v1340
    %v1348 = vmul.f32 %v1333, %v1344
    %v1349 = vmul.f32 %v1334, %v1340
    %v1350 = vmul.f32 %v1335, %v1344
    %v1352 = vlaneseq
    %v1353 = vshrl.u32 %v1352, 7
    %v1354 = vsub.s32 0, %v1353
    %v1355 = vrot.slane %v1266, %v1354
    %v1356 = vlaneseq
    %v1357 = vshrl.u32 %v1356, 7
    %v1358 = vsub.s32 1, %v1357
    %v1359 = vrot.slane %v1266, %v1358
    %v1362 = vadd.f32 %v1347, %v1355
    %v1363 = vadd.f32 %v1348, %v1359
    %v1364 = vadd.f32 %v1349, %v1355
    %v1365 = vadd.f32 %v1350, %v1359
    %v1366 = vmax.f32 %v1362, 0.0
    %v1367 = vmax.f32 %v1363, 0.0
    %v1368 = vmax.f32 %v1364, 0.0
    %v1369 = vmax.f32 %v1365, 0.0
    %v1370 = vmul.f32 %v1366, %v107
    %v1371 = vmul.f32 %v1367, %v107
    %v1372 = vmul.f32 %v1368, %v108
    %v1373 = vmul.f32 %v1369, %v108
    %s1374 = smul.u32 4, 32
    %s1375 = smul.u32 %s1374, 2
    %s1376 = sshll.u32 %s1375, 4
    %1377 = dma.done [#allocation4], %s1376
    %v1378 = vpack.c.bf16 %v1372, %v1370
    %v1379 = vpack.c.bf16 %v1373, %v1371
    %v1380 = vld [vmem:[#allocation2] sm:$0xff]
    %v1381 = vld [vmem:[#allocation2 + $0x8] sm:$0xff]
    %v1382 = vld [vmem:[#allocation2 + $0x10] sm:$0xff]
    %v1383 = vld [vmem:[#allocation2 + $0x18] sm:$0xff]
    %v1384 = vld [vmem:[#allocation2 + $0x20] sm:$0xff]
    %v1385 = vld [vmem:[#allocation2 + $0x28] sm:$0xff]
    %v1386 = vld [vmem:[#allocation2 + $0x30] sm:$0xff]
    %v1387 = vld [vmem:[#allocation2 + $0x38] sm:$0xff]
    %v1388 = vld [vmem:[#allocation2 + $0x40] sm:$0xff]
    %v1389 = vld [vmem:[#allocation2 + $0x48] sm:$0xff]
    %v1390 = vld [vmem:[#allocation2 + $0x50] sm:$0xff]
    %v1391 = vld [vmem:[#allocation2 + $0x58] sm:$0xff]
    %v1392 = vld [vmem:[#allocation2 + $0x60] sm:$0xff]
    %v1393 = vld [vmem:[#allocation2 + $0x68] sm:$0xff]
    %v1394 = vld [vmem:[#allocation2 + $0x70] sm:$0xff]
    %v1395 = vld [vmem:[#allocation2 + $0x78] sm:$0xff]
    %v1396 = vld [vmem:[#allocation2 + $0x80] sm:$0xff]
    %v1397 = vld [vmem:[#allocation2 + $0x88] sm:$0xff]
    %v1398 = vld [vmem:[#allocation2 + $0x90] sm:$0xff]
    %v1399 = vld [vmem:[#allocation2 + $0x98] sm:$0xff]
    %v1400 = vld [vmem:[#allocation2 + $0xa0] sm:$0xff]
    %v1401 = vld [vmem:[#allocation2 + $0xa8] sm:$0xff]
    %v1402 = vld [vmem:[#allocation2 + $0xb0] sm:$0xff]
    %v1403 = vld [vmem:[#allocation2 + $0xb8] sm:$0xff]
    %v1404 = vld [vmem:[#allocation2 + $0xc0] sm:$0xff]
    %v1405 = vld [vmem:[#allocation2 + $0xc8] sm:$0xff]
    %v1406 = vld [vmem:[#allocation2 + $0xd0] sm:$0xff]
    %v1407 = vld [vmem:[#allocation2 + $0xd8] sm:$0xff]
    %v1408 = vld [vmem:[#allocation2 + $0xe0] sm:$0xff]
    %v1409 = vld [vmem:[#allocation2 + $0xe8] sm:$0xff]
    %v1410 = vld [vmem:[#allocation2 + $0xf0] sm:$0xff]
    %v1411 = vld [vmem:[#allocation2 + $0xf8] sm:$0xff]
    %v1444 = vunpack.c.l.b16 %v1380
    %v1445 = vunpack.c.h.b16 %v1380
    %v1446 = vunpack.c.l.b16 %v1381
    %v1447 = vunpack.c.h.b16 %v1381
    %v1448 = vunpack.c.l.b16 %v1382
    %v1449 = vunpack.c.h.b16 %v1382
    %v1450 = vunpack.c.l.b16 %v1383
    %v1451 = vunpack.c.h.b16 %v1383
    %v1452 = vunpack.c.l.b16 %v1384
    %v1453 = vunpack.c.h.b16 %v1384
    %v1454 = vunpack.c.l.b16 %v1385
    %v1455 = vunpack.c.h.b16 %v1385
    %v1456 = vunpack.c.l.b16 %v1386
    %v1457 = vunpack.c.h.b16 %v1386
    %v1458 = vunpack.c.l.b16 %v1387
    %v1459 = vunpack.c.h.b16 %v1387
    %v1460 = vunpack.c.l.b16 %v1388
    %v1461 = vunpack.c.h.b16 %v1388
    %v1462 = vunpack.c.l.b16 %v1389
    %v1463 = vunpack.c.h.b16 %v1389
    %v1464 = vunpack.c.l.b16 %v1390
    %v1465 = vunpack.c.h.b16 %v1390
    %v1466 = vunpack.c.l.b16 %v1391
    %v1467 = vunpack.c.h.b16 %v1391
    %v1468 = vunpack.c.l.b16 %v1392
    %v1469 = vunpack.c.h.b16 %v1392
    %v1470 = vunpack.c.l.b16 %v1393
    %v1471 = vunpack.c.h.b16 %v1393
    %v1472 = vunpack.c.l.b16 %v1394
    %v1473 = vunpack.c.h.b16 %v1394
    %v1474 = vunpack.c.l.b16 %v1395
    %v1475 = vunpack.c.h.b16 %v1395
    %v1476 = vunpack.c.l.b16 %v1396
    %v1477 = vunpack.c.h.b16 %v1396
    %v1478 = vunpack.c.l.b16 %v1397
    %v1479 = vunpack.c.h.b16 %v1397
    %v1480 = vunpack.c.l.b16 %v1398
    %v1481 = vunpack.c.h.b16 %v1398
    %v1482 = vunpack.c.l.b16 %v1399
    %v1483 = vunpack.c.h.b16 %v1399
    %v1484 = vunpack.c.l.b16 %v1400
    %v1485 = vunpack.c.h.b16 %v1400
    %v1486 = vunpack.c.l.b16 %v1401
    %v1487 = vunpack.c.h.b16 %v1401
    %v1488 = vunpack.c.l.b16 %v1402
    %v1489 = vunpack.c.h.b16 %v1402
    %v1490 = vunpack.c.l.b16 %v1403
    %v1491 = vunpack.c.h.b16 %v1403
    %v1492 = vunpack.c.l.b16 %v1404
    %v1493 = vunpack.c.h.b16 %v1404
    %v1494 = vunpack.c.l.b16 %v1405
    %v1495 = vunpack.c.h.b16 %v1405
    %v1496 = vunpack.c.l.b16 %v1406
    %v1497 = vunpack.c.h.b16 %v1406
    %v1498 = vunpack.c.l.b16 %v1407
    %v1499 = vunpack.c.h.b16 %v1407
    %v1500 = vunpack.c.l.b16 %v1408
    %v1501 = vunpack.c.h.b16 %v1408
    %v1502 = vunpack.c.l.b16 %v1409
    %v1503 = vunpack.c.h.b16 %v1409
    %v1504 = vunpack.c.l.b16 %v1410
    %v1505 = vunpack.c.h.b16 %v1410
    %v1506 = vunpack.c.l.b16 %v1411
    %v1507 = vunpack.c.h.b16 %v1411
    %v1508 = vpack.c.b16 %v1446, %v1444
    %v1509 = vpack.c.b16 %v1447, %v1445
    %v1510 = vpack.c.b16 %v1450, %v1448
    %v1511 = vpack.c.b16 %v1451, %v1449
    %v1512 = vpack.c.b16 %v1454, %v1452
    %v1513 = vpack.c.b16 %v1455, %v1453
    %v1514 = vpack.c.b16 %v1458, %v1456
    %v1515 = vpack.c.b16 %v1459, %v1457
    %v1516 = vpack.c.b16 %v1462, %v1460
    %v1517 = vpack.c.b16 %v1463, %v1461
    %v1518 = vpack.c.b16 %v1466, %v1464
    %v1519 = vpack.c.b16 %v1467, %v1465
    %v1520 = vpack.c.b16 %v1470, %v1468
    %v1521 = vpack.c.b16 %v1471, %v1469
    %v1522 = vpack.c.b16 %v1474, %v1472
    %v1523 = vpack.c.b16 %v1475, %v1473
    %v1524 = vpack.c.b16 %v1478, %v1476
    %v1525 = vpack.c.b16 %v1479, %v1477
    %v1526 = vpack.c.b16 %v1482, %v1480
    %v1527 = vpack.c.b16 %v1483, %v1481
    %v1528 = vpack.c.b16 %v1486, %v1484
    %v1529 = vpack.c.b16 %v1487, %v1485
    %v1530 = vpack.c.b16 %v1490, %v1488
    %v1531 = vpack.c.b16 %v1491, %v1489
    %v1532 = vpack.c.b16 %v1494, %v1492
    %v1533 = vpack.c.b16 %v1495, %v1493
    %v1534 = vpack.c.b16 %v1498, %v1496
    %v1535 = vpack.c.b16 %v1499, %v1497
    %v1536 = vpack.c.b16 %v1502, %v1500
    %v1537 = vpack.c.b16 %v1503, %v1501
    %v1538 = vpack.c.b16 %v1506, %v1504
    %v1539 = vpack.c.b16 %v1507, %v1505
    %1572 = vmatprep.subr.bf16.mxu0 %v1523
    %1573 = vmatpush1.bf16.msra.mxu0 %v1522
    %1574 = vmatprep.subr.bf16.mxu0 %v1521
    %1575 = vmatpush1.bf16.msra.mxu0 %v1520
    %1576 = vmatprep.subr.bf16.mxu0 %v1519
    %1577 = vmatpush1.bf16.msra.mxu0 %v1518
    %1578 = vmatprep.subr.bf16.mxu0 %v1517
    %1579 = vmatpush1.bf16.msra.mxu0 %v1516
    %1580 = vmatprep.subr.bf16.mxu0 %v1515
    %1581 = vmatpush1.bf16.msra.mxu0 %v1514
    %1582 = vmatprep.subr.bf16.mxu0 %v1513
    %1583 = vmatpush1.bf16.msra.mxu0 %v1512
    %1584 = vmatprep.subr.bf16.mxu0 %v1511
    %1585 = vmatpush1.bf16.msra.mxu0 %v1510
    %1586 = vmatprep.subr.bf16.mxu0 %v1509
    %1587 = vmatpush1.bf16.msra.mxu0 %v1508
    %1588 = vmatprep.subr.bf16.mxu0 %v1539
    %1589 = vmatpush2.bf16.msra.mxu0 %v1538
    %1590 = vmatprep.subr.bf16.mxu0 %v1537
    %1591 = vmatpush2.bf16.msra.mxu0 %v1536
    %1592 = vmatprep.subr.bf16.mxu0 %v1535
    %1593 = vmatpush2.bf16.msra.mxu0 %v1534
    %1594 = vmatprep.subr.bf16.mxu0 %v1533
    %1595 = vmatpush2.bf16.msra.mxu0 %v1532
    %1596 = vmatprep.subr.bf16.mxu0 %v1531
    %1597 = vmatpush2.bf16.msra.mxu0 %v1530
    %1598 = vmatprep.subr.bf16.mxu0 %v1529
    %1599 = vmatpush2.bf16.msra.mxu0 %v1528
    %1600 = vmatprep.subr.bf16.mxu0 %v1527
    %1601 = vmatpush2.bf16.msra.mxu0 %v1526
    %1602 = vmatprep.subr.bf16.mxu0 %v1525
    %1603 = vmatpush2.bf16.msra.mxu0 %v1524
    %1604 = vmatprep.mubr.bf16.mxu0 %v1379
    %1605 = vmatmul.mubr.bf16.gmra.mxu0 %v1378
    %v1606 = vpop.f32.mrf.mxu0
    %v1607 = vadd.f32 0.0, %v1606
    %v1608 = vpop.f32.mrf.mxu0
    %v1609 = vadd.f32 0.0, %v1608
    %v1610 = vpop.f32.mrf.mxu0
    %v1611 = vadd.f32 0.0, %v1610
    %v1612 = vpop.f32.mrf.mxu0
    %v1613 = vadd.f32 0.0, %v1612
    %1614 = vdwg.mxu0
    %s1615 = scalar_lea.vmem [#allocation11], 4
    %v1616 = vld [vmem:[%s1615] ss:$8 sm:$0x3]
    %s1617 = scalar_lea.vmem [#allocation11], 5
    %v1618 = vld [vmem:[%s1617] ss:$8 sm:$0x3]
    %v1619 = vadd.f32 %v1607, %v1611
    %v1620 = vrot.slane %v1619, 4
    %v1621 = vadd.f32 %v1619, %v1620
    %v1622 = vrot.slane %v1621, 2
    %v1623 = vadd.f32 %v1621, %v1622
    %v1624 = vrot.slane %v1623, 1
    %v1625 = vadd.f32 %v1623, %v1624
    %v1626 = vadd.f32 %v1609, %v1613
    %v1627 = vrot.slane %v1626, 4
    %v1628 = vadd.f32 %v1626, %v1627
    %v1629 = vrot.slane %v1628, 2
    %v1630 = vadd.f32 %v1628, %v1629
    %v1631 = vrot.slane %v1630, 1
    %v1632 = vadd.f32 %v1630, %v1631
    %v1633 = vmul.f32 %v1625, 0.25
    %v1634 = vmul.f32 %v1632, 0.25
    %v1635 = vmul.f32 %v1607, %v1607
    %v1636 = vmul.f32 %v1609, %v1609
    %v1637 = vmul.f32 %v1611, %v1611
    %v1638 = vmul.f32 %v1613, %v1613
    %v1639 = vadd.f32 %v1635, %v1637
    %v1640 = vrot.slane %v1639, 4
    %v1641 = vadd.f32 %v1639, %v1640
    %v1642 = vrot.slane %v1641, 2
    %v1643 = vadd.f32 %v1641, %v1642
    %v1644 = vrot.slane %v1643, 1
    %v1645 = vadd.f32 %v1643, %v1644
    %v1646 = vadd.f32 %v1636, %v1638
    %v1647 = vrot.slane %v1646, 4
    %v1648 = vadd.f32 %v1646, %v1647
    %v1649 = vrot.slane %v1648, 2
    %v1650 = vadd.f32 %v1648, %v1649
    %v1651 = vrot.slane %v1650, 1
    %v1652 = vadd.f32 %v1650, %v1651
    %v1653 = vmul.f32 %v1645, 0.25
    %v1654 = vmul.f32 %v1652, 0.25
    %v1655 = vmul.f32 %v1633, %v1633
    %v1656 = vmul.f32 %v1634, %v1634
    %v1657 = vsub.f32 %v1653, %v1655
    %v1658 = vsub.f32 %v1654, %v1656
    %v1659 = vmax.f32 %v1657, 0.0
    %v1660 = vmax.f32 %v1658, 0.0
    %v1661 = vadd.f32 %v1659, 1e-05
    %v1662 = vadd.f32 %v1660, 1e-05
    %v1663 = vrsqrt.pop %v1661
    %v1664 = vrsqrt.pop %v1662
    %v1667 = vcombine.low %v1663, %v1664
    %v1669 = vunpack.c.l.s4 1966171168
    %v1670 = vunpack.c.0.s8 %v1669
    %v1671 = vlaneseq
    %v1672 = vshrl.u32 %v1671, 7
    %v1673 = vsub.s32 %v1670, %v1672
    %v1674 = vrot.slane %v1667, %v1673
    %v1676 = vunpack.c.l.s4 1966171168
    %v1677 = vunpack.c.0.s8 %v1676
    %v1678 = vlaneseq
    %v1679 = vshrl.u32 %v1678, 7
    %v1680 = vsub.s32 %v1677, %v1679
    %v1681 = vrot.slane %v1674, %v1680
    %v1683 = vmul.f32 %v1616, %v1681
    %v1684 = vsub.f32 %v1607, %v1633
    %v1685 = vsub.f32 %v1609, %v1634
    %v1686 = vsub.f32 %v1611, %v1633
    %v1687 = vsub.f32 %v1613, %v1634
    %v1689 = vlaneseq
    %v1690 = vshrl.u32 %v1689, 7
    %v1691 = vsub.s32 0, %v1690
    %v1692 = vrot.slane %v1683, %v1691
    %v1693 = vlaneseq
    %v1694 = vshrl.u32 %v1693, 7
    %v1695 = vsub.s32 1, %v1694
    %v1696 = vrot.slane %v1683, %v1695
    %v1699 = vmul.f32 %v1684, %v1692
    %v1700 = vmul.f32 %v1685, %v1696
    %v1701 = vmul.f32 %v1686, %v1692
    %v1702 = vmul.f32 %v1687, %v1696
    %v1704 = vlaneseq
    %v1705 = vshrl.u32 %v1704, 7
    %v1706 = vsub.s32 0, %v1705
    %v1707 = vrot.slane %v1618, %v1706
    %v1708 = vlaneseq
    %v1709 = vshrl.u32 %v1708, 7
    %v1710 = vsub.s32 1, %v1709
    %v1711 = vrot.slane %v1618, %v1710
    %v1714 = vadd.f32 %v1699, %v1707
    %v1715 = vadd.f32 %v1700, %v1711
    %v1716 = vadd.f32 %v1701, %v1707
    %v1717 = vadd.f32 %v1702, %v1711
    %v1718 = vmax.f32 %v1714, 0.0
    %v1719 = vmax.f32 %v1715, 0.0
    %v1720 = vmax.f32 %v1716, 0.0
    %v1721 = vmax.f32 %v1717, 0.0
    %v1722 = vmul.f32 %v1718, %v107
    %v1723 = vmul.f32 %v1719, %v107
    %v1724 = vmul.f32 %v1720, %v108
    %v1725 = vmul.f32 %v1721, %v108
    %s1726 = smul.u32 %s1374, 1
    %s1727 = sshll.u32 %s1726, 4
    %1728 = dma.done %s88, %s1727
    %v1729 = vpack.c.bf16 %v1724, %v1722
    %v1730 = vpack.c.bf16 %v1725, %v1723
    %v1731 = vld [vmem:[#allocation3] sm:$0xf]
    %v1732 = vld [vmem:[#allocation3 + $0x4] sm:$0xf]
    %v1733 = vld [vmem:[#allocation3 + $0x8] sm:$0xf]
    %v1734 = vld [vmem:[#allocation3 + $0xc] sm:$0xf]
    %v1735 = vld [vmem:[#allocation3 + $0x10] sm:$0xf]
    %v1736 = vld [vmem:[#allocation3 + $0x14] sm:$0xf]
    %v1737 = vld [vmem:[#allocation3 + $0x18] sm:$0xf]
    %v1738 = vld [vmem:[#allocation3 + $0x1c] sm:$0xf]
    %v1739 = vld [vmem:[#allocation3 + $0x20] sm:$0xf]
    %v1740 = vld [vmem:[#allocation3 + $0x24] sm:$0xf]
    %v1741 = vld [vmem:[#allocation3 + $0x28] sm:$0xf]
    %v1742 = vld [vmem:[#allocation3 + $0x2c] sm:$0xf]
    %v1743 = vld [vmem:[#allocation3 + $0x30] sm:$0xf]
    %v1744 = vld [vmem:[#allocation3 + $0x34] sm:$0xf]
    %v1745 = vld [vmem:[#allocation3 + $0x38] sm:$0xf]
    %v1746 = vld [vmem:[#allocation3 + $0x3c] sm:$0xf]
    %v1747 = vld [vmem:[#allocation3 + $0x40] sm:$0xf]
    %v1748 = vld [vmem:[#allocation3 + $0x44] sm:$0xf]
    %v1749 = vld [vmem:[#allocation3 + $0x48] sm:$0xf]
    %v1750 = vld [vmem:[#allocation3 + $0x4c] sm:$0xf]
    %v1751 = vld [vmem:[#allocation3 + $0x50] sm:$0xf]
    %v1752 = vld [vmem:[#allocation3 + $0x54] sm:$0xf]
    %v1753 = vld [vmem:[#allocation3 + $0x58] sm:$0xf]
    %v1754 = vld [vmem:[#allocation3 + $0x5c] sm:$0xf]
    %v1755 = vld [vmem:[#allocation3 + $0x60] sm:$0xf]
    %v1756 = vld [vmem:[#allocation3 + $0x64] sm:$0xf]
    %v1757 = vld [vmem:[#allocation3 + $0x68] sm:$0xf]
    %v1758 = vld [vmem:[#allocation3 + $0x6c] sm:$0xf]
    %v1759 = vld [vmem:[#allocation3 + $0x70] sm:$0xf]
    %v1760 = vld [vmem:[#allocation3 + $0x74] sm:$0xf]
    %v1761 = vld [vmem:[#allocation3 + $0x78] sm:$0xf]
    %v1762 = vld [vmem:[#allocation3 + $0x7c] sm:$0xf]
    %v1763 = vld [vmem:[%s4] sm:$0x1]
    %v1765 = vlaneseq
    %v1766 = vshrl.u32 %v1765, 7
    %v1767 = vsub.s32 0, %v1766
    %v1768 = vrot.slane %v1763, %v1767
    %v1802 = vunpack.c.l.b16 %v1731
    %v1803 = vunpack.c.l.b16 %v1732
    %v1804 = vunpack.c.l.b16 %v1733
    %v1805 = vunpack.c.l.b16 %v1734
    %v1806 = vunpack.c.l.b16 %v1735
    %v1807 = vunpack.c.l.b16 %v1736
    %v1808 = vunpack.c.l.b16 %v1737
    %v1809 = vunpack.c.l.b16 %v1738
    %v1810 = vunpack.c.l.b16 %v1739
    %v1811 = vunpack.c.l.b16 %v1740
    %v1812 = vunpack.c.l.b16 %v1741
    %v1813 = vunpack.c.l.b16 %v1742
    %v1814 = vunpack.c.l.b16 %v1743
    %v1815 = vunpack.c.l.b16 %v1744
    %v1816 = vunpack.c.l.b16 %v1745
    %v1817 = vunpack.c.l.b16 %v1746
    %v1818 = vunpack.c.l.b16 %v1747
    %v1819 = vunpack.c.l.b16 %v1748
    %v1820 = vunpack.c.l.b16 %v1749
    %v1821 = vunpack.c.l.b16 %v1750
    %v1822 = vunpack.c.l.b16 %v1751
    %v1823 = vunpack.c.l.b16 %v1752
    %v1824 = vunpack.c.l.b16 %v1753
    %v1825 = vunpack.c.l.b16 %v1754
    %v1826 = vunpack.c.l.b16 %v1755
    %v1827 = vunpack.c.l.b16 %v1756
    %v1828 = vunpack.c.l.b16 %v1757
    %v1829 = vunpack.c.l.b16 %v1758
    %v1830 = vunpack.c.l.b16 %v1759
    %v1831 = vunpack.c.l.b16 %v1760
    %v1832 = vunpack.c.l.b16 %v1761
    %v1833 = vunpack.c.l.b16 %v1762
    %v1834 = vpack.c.b16 %v1803, %v1802
    %v1835 = vpack.c.b16 %v1805, %v1804
    %v1836 = vpack.c.b16 %v1807, %v1806
    %v1837 = vpack.c.b16 %v1809, %v1808
    %v1838 = vpack.c.b16 %v1811, %v1810
    %v1839 = vpack.c.b16 %v1813, %v1812
    %v1840 = vpack.c.b16 %v1815, %v1814
    %v1841 = vpack.c.b16 %v1817, %v1816
    %v1842 = vpack.c.b16 %v1819, %v1818
    %v1843 = vpack.c.b16 %v1821, %v1820
    %v1844 = vpack.c.b16 %v1823, %v1822
    %v1845 = vpack.c.b16 %v1825, %v1824
    %v1846 = vpack.c.b16 %v1827, %v1826
    %v1847 = vpack.c.b16 %v1829, %v1828
    %v1848 = vpack.c.b16 %v1831, %v1830
    %v1849 = vpack.c.b16 %v1833, %v1832
    %1866 = vmatprep.subr.bf16.mxu0 0
    %1867 = vmatpush1.bf16.msra.mxu0 %v1841
    %1868 = vmatprep.subr.bf16.mxu0 0
    %1869 = vmatpush1.bf16.msra.mxu0 %v1840
    %1870 = vmatprep.subr.bf16.mxu0 0
    %1871 = vmatpush1.bf16.msra.mxu0 %v1839
    %1872 = vmatprep.subr.bf16.mxu0 0
    %1873 = vmatpush1.bf16.msra.mxu0 %v1838
    %1874 = vmatprep.subr.bf16.mxu0 0
    %1875 = vmatpush1.bf16.msra.mxu0 %v1837
    %1876 = vmatprep.subr.bf16.mxu0 0
    %1877 = vmatpush1.bf16.msra.mxu0 %v1836
    %1878 = vmatprep.subr.bf16.mxu0 0
    %1879 = vmatpush1.bf16.msra.mxu0 %v1835
    %1880 = vmatprep.subr.bf16.mxu0 0
    %1881 = vmatpush1.bf16.msra.mxu0 %v1834
    %1882 = vmatprep.subr.bf16.mxu0 0
    %1883 = vmatpush2.bf16.msra.mxu0 %v1849
    %1884 = vmatprep.subr.bf16.mxu0 0
    %1885 = vmatpush2.bf16.msra.mxu0 %v1848
    %1886 = vmatprep.subr.bf16.mxu0 0
    %1887 = vmatpush2.bf16.msra.mxu0 %v1847
    %1888 = vmatprep.subr.bf16.mxu0 0
    %1889 = vmatpush2.bf16.msra.mxu0 %v1846
    %1890 = vmatprep.subr.bf16.mxu0 0
    %1891 = vmatpush2.bf16.msra.mxu0 %v1845
    %1892 = vmatprep.subr.bf16.mxu0 0
    %1893 = vmatpush2.bf16.msra.mxu0 %v1844
    %1894 = vmatprep.subr.bf16.mxu0 0
    %1895 = vmatpush2.bf16.msra.mxu0 %v1843
    %1896 = vmatprep.subr.bf16.mxu0 0
    %1897 = vmatpush2.bf16.msra.mxu0 %v1842
    %1898 = vmatprep.mubr.bf16.mxu0 %v1730
    %1899 = vmatmul.mubr.bf16.gmra.mxu0 %v1729
    %v1900 = vpop.f32.mrf.mxu0
    %v1901 = vadd.f32 %v1768, %v1900
    %v1902 = vpop.f32.mrf.mxu0
    %v1903 = vpop.f32.mrf.mxu0
    %v1904 = vadd.f32 %v1768, %v1903
    %v1905 = vpop.f32.mrf.mxu0
    %1906 = vdwg.mxu0
    %1907 = vst [vmem:[#allocation13] sm:$0xff] %v1901
    %1908 = vst [vmem:[#allocation13 + $0x8] sm:$0xff] %v1904
    // Predicated region
    $region46: #{tpu_custom_call.1} parent=1 // pred_check
      _
    $region47: #{tpu_custom_call.1} parent=1 // pred_check_branch
      %1910 = sbr.rel (0) target = $region49
    $region48: #{tpu_custom_call.1} parent=1 // pred_region
      %s1912 = ssub.s32 256, 256
      %1913 = vsyncadd [#allocation7], %s1912
      %s1914 = sshll.u32 [#allocation13], 4
      %s1915 = int_to_ptr.vmem [resolvable:$true] %s1914
      %1920 = dma.vmem_to_hbm [thread:$0]  %s1915, 256, %s7, [#allocation7], 128, 128, 8
    $region49: #{tpu_custom_call.1} parent=1 // pred_fallthru
      _
    // Predicated region
    $region50: #{tpu_custom_call.1} parent=1 // pred_check
      _
    $region51: #{tpu_custom_call.1} parent=1 // pred_check_branch
      %1922 = sbr.rel (0) target = $region53
    $region52: #{tpu_custom_call.1} parent=1 // pred_region
      %1923 = dma.done [#allocation7], 256
    $region53: #{tpu_custom_call.1} parent=1 // pred_fallthru
      _
    %1924 = vsyncpa [#allocation6], 1
    %1925 = vsyncpa [#allocation9], 1
    %1926 = vsyncpa [#allocation12], 1
    %1927 = vsyncpa [#allocation7], 1
  %1928 = vsyncmov [#allocation4]
  %s1929 = vpop.sfrf %1928
  %p1930 = scmp.eq.s32.totalorder %s1929, 0
  %p1931 = pneg %p1930
  %1933 = shalt.err (%p1931)
  %s1934 = scalar_lea.sflag [#allocation4], 1
  %1935 = vsyncmov %s1934
  %s1936 = vpop.sfrf %1935
  %p1937 = scmp.eq.s32.totalorder %s1936, 0
  %p1938 = pneg %p1937
  %1940 = shalt.err (%p1938)

</llo_original>
